<compile_context>
chip_gen: v5e
topology: v5e:2x2
jax: 0.10.0
libtpu: 0.0.40
codegen_flags: <defaults>
</compile_context>

<pallas_src>
import jax
import jax.numpy as jnp
from jax.experimental import pallas as pl
from jax.experimental.pallas import tpu as pltpu

# ----- small, structure-preserving configuration ----------------------------
BATCH = 2
NUM_TOKENS = 8                      # sequence length (num_tokens)
TOKEN_DIM = 128                     # input_dim // num_tokens
INPUT_DIM = NUM_TOKENS * TOKEN_DIM  # 1024
D_MODEL = 128
NHEAD = 4
HEAD_DIM = D_MODEL // NHEAD
NUM_LAYERS = 2
DIM_FF = 256
OUTPUT_DIM = 1
LN_EPS = 1e-5
NEG_INF = -1e30


def _layernorm(x, gamma, beta):
    mean = jnp.mean(x, axis=-1, keepdims=True)
    xm = x - mean                                        # computed once, reused
    var = jnp.mean(xm * xm, axis=-1, keepdims=True)
    return xm * jax.lax.rsqrt(var + LN_EPS) * gamma + beta


# ----- fused kernel (one batch element per grid step) -------------------------
def transformer_regressor_kernel(
    x_ref, posb_ref, mask_ref, win_ref,
    qkvw_ref, qkvb_ref, ow_ref, ob_ref,
    ln1w_ref, ln1b_ref,
    ff1w_ref, ff1b_ref, ff2w_ref, ff2b_ref,
    ln2w_ref, ln2b_ref,
    fcw_ref, fcb_ref,
    o_ref,
):
    T, D = posb_ref.shape
    L = qkvw_ref.shape[0]
    H = NHEAD
    Dh = D // H

    # input projection; pos_embedding + input_proj bias are pre-folded into posb.
    x = x_ref[0]                                                       # (T, TOKEN_DIM)
    h = jnp.dot(x, win_ref[...], preferred_element_type=jnp.float32) + posb_ref[...]

    # transformer encoder layers (post-norm, ReLU FFN), statically unrolled
    for l in range(L):
        # fused QKV projection; 1/sqrt(Dh) already folded into the Q columns.
        qkv = jnp.dot(h, qkvw_ref[l], preferred_element_type=jnp.float32) + qkvb_ref[l]

        # head-major stacking: rows ordered (head, token) -> (H*T, Dh)
        qs = jnp.concatenate([qkv[:, hh * Dh:(hh + 1) * Dh] for hh in range(H)], axis=0)
        ks = jnp.concatenate([qkv[:, D + hh * Dh:D + (hh + 1) * Dh] for hh in range(H)], axis=0)
        vs = jnp.concatenate([qkv[:, 2 * D + hh * Dh:2 * D + (hh + 1) * Dh] for hh in range(H)], axis=0)

        # scores for ALL heads with one MXU call (contract last dims -> no transpose);
        # cross-head blocks are removed by the precomputed additive mask.
        s = jax.lax.dot_general(qs, ks, (((1,), (1,)), ((), ())),
                                preferred_element_type=jnp.float32)    # (H*T, H*T)
        s = s + mask_ref[...]
        s = s - jnp.max(s, axis=-1, keepdims=True)
        p = jnp.exp(s)
        p = p * pl.reciprocal(jnp.sum(p, axis=-1, keepdims=True), approx=True)
        av = jnp.dot(p, vs, preferred_element_type=jnp.float32)        # (H*T, Dh)

        # un-stack heads back onto the lane (feature) axis
        attn = jnp.concatenate([av[hh * T:(hh + 1) * T, :] for hh in range(H)], axis=-1)
        attn = jnp.dot(attn, ow_ref[l], preferred_element_type=jnp.float32) + ob_ref[l]

        h = _layernorm(h + attn, ln1w_ref[l], ln1b_ref[l])

        ff = jnp.dot(h, ff1w_ref[l], preferred_element_type=jnp.float32) + ff1b_ref[l]
        ff = jnp.maximum(ff, 0.0)
        ff = jnp.dot(ff, ff2w_ref[l], preferred_element_type=jnp.float32) + ff2b_ref[l]

        h = _layernorm(h + ff, ln2w_ref[l], ln2b_ref[l])

    # AdaptiveAvgPool1d(1) over tokens, then fc_out as VPU multiply + lane reduce
    # (fcw is stored pre-transposed as (1, D); valid for OUTPUT_DIM == 1).
    pooled = jnp.mean(h, axis=0, keepdims=True)                        # (1, D)
    out = jnp.sum(pooled * fcw_ref[...], axis=-1, keepdims=True) + fcb_ref[...]
    o_ref[...] = out.reshape(1, 1, OUTPUT_DIM)


# ----- wrapper ----------------------------------------------------------------
def _full_spec(a):
    # full-array block, constant index map -> resident across the batch grid
    return pl.BlockSpec(a.shape, lambda b, _n=a.ndim: (0,) * _n)


def transformer_regressor(x, kparams):
    B = x.shape[0]
    x_tok = x.reshape(B, NUM_TOKENS, TOKEN_DIM)
    weight_order = ("posb", "mask", "win", "qkvw", "qkvb", "ow", "ob",
                    "ln1w", "ln1b", "ff1w", "ff1b", "ff2w", "ff2b",
                    "ln2w", "ln2b", "fcw", "fcb")
    weights = tuple(kparams[name] for name in weight_order)

    in_specs = [pl.BlockSpec((1, NUM_TOKENS, TOKEN_DIM), lambda b: (b, 0, 0))]
    in_specs += [_full_spec(w) for w in weights]

    out = pl.pallas_call(
        transformer_regressor_kernel,
        out_shape=jax.ShapeDtypeStruct((B, 1, OUTPUT_DIM), jnp.float32),
        grid=(B,),
        in_specs=in_specs,
        out_specs=pl.BlockSpec((1, 1, OUTPUT_DIM), lambda b: (b, 0, 0)),
        compiler_params=pltpu.CompilerParams(
            dimension_semantics=("parallel",),
            vmem_limit_bytes=16 * 1024 * 1024,
        ),
    )(x_tok, *weights)
    return out.reshape(B, OUTPUT_DIM)


# ----- deterministic parameter init (shapes follow the nn.Module __init__) ----
def init_params(key):
    ks = jax.random.split(key, 8)

    def w(k, shape, scale=0.02):
        return scale * jax.random.normal(k, shape, dtype=jnp.float32)

    return dict(
        win=w(ks[0], (TOKEN_DIM, D_MODEL)),                        # input_proj.weight.T
        bin=w(ks[0], (1, D_MODEL), 0.01),                          # input_proj.bias
        pos=w(ks[1], (NUM_TOKENS, D_MODEL), 1.0),                  # pos_embedding (randn)
        qkvw=w(ks[2], (NUM_LAYERS, D_MODEL, 3 * D_MODEL)),         # in_proj_weight.T
        qkvb=w(ks[2], (NUM_LAYERS, 1, 3 * D_MODEL), 0.01),
        ow=w(ks[3], (NUM_LAYERS, D_MODEL, D_MODEL)),               # out_proj.weight.T
        ob=w(ks[3], (NUM_LAYERS, 1, D_MODEL), 0.01),
        ln1w=jnp.ones((NUM_LAYERS, 1, D_MODEL), jnp.float32),
        ln1b=jnp.zeros((NUM_LAYERS, 1, D_MODEL), jnp.float32),
        ff1w=w(ks[4], (NUM_LAYERS, D_MODEL, DIM_FF)),              # linear1.weight.T
        ff1b=w(ks[4], (NUM_LAYERS, 1, DIM_FF), 0.01),
        ff2w=w(ks[5], (NUM_LAYERS, DIM_FF, D_MODEL)),              # linear2.weight.T
        ff2b=w(ks[5], (NUM_LAYERS, 1, D_MODEL), 0.01),
        ln2w=jnp.ones((NUM_LAYERS, 1, D_MODEL), jnp.float32),
        ln2b=jnp.zeros((NUM_LAYERS, 1, D_MODEL), jnp.float32),
        fcw=w(ks[6], (D_MODEL, OUTPUT_DIM)),                       # fc_out.weight.T
        fcb=w(ks[6], (1, OUTPUT_DIM), 0.01),
    )


# ----- one-time host-side parameter transforms for the kernel ------------------
def prepare_params(params):
    scale = 1.0 / (HEAD_DIM ** 0.5)
    qscale = jnp.concatenate([
        jnp.full((D_MODEL,), scale, jnp.float32),
        jnp.ones((2 * D_MODEL,), jnp.float32),
    ])
    blk = jnp.arange(NHEAD * NUM_TOKENS, dtype=jnp.int32) // NUM_TOKENS
    mask = jnp.where(blk[:, None] == blk[None, :], 0.0, NEG_INF).astype(jnp.float32)

    kp = {k: v for k, v in params.items()
          if k not in ("pos", "bin", "qkvw", "qkvb", "fcw")}
    kp["posb"] = params["pos"] + params["bin"]                 # (T, D)
    kp["qkvw"] = params["qkvw"] * qscale[None, None, :]        # scale folded into Q
    kp["qkvb"] = params["qkvb"] * qscale[None, None, :]
    kp["fcw"] = params["fcw"].T                                # (1, D) for lane-reduce
    kp["mask"] = mask                                          # (H*T, H*T) additive mask
    return kp


# ----- pure-JAX reference (same math, batched, raw params) --------------------
def reference(x, params):
    B = x.shape[0]
    h = x.reshape(B, NUM_TOKENS, TOKEN_DIM) @ params["win"] + params["bin"]
    h = h + params["pos"][None]
    for l in range(NUM_LAYERS):
        qkv = h @ params["qkvw"][l] + params["qkvb"][l]
        q, k, v = jnp.split(qkv, 3, axis=-1)
        q = q.reshape(B, NUM_TOKENS, NHEAD, HEAD_DIM).transpose(0, 2, 1, 3)
        k = k.reshape(B, NUM_TOKENS, NHEAD, HEAD_DIM).transpose(0, 2, 1, 3)
        v = v.reshape(B, NUM_TOKENS, NHEAD, HEAD_DIM).transpose(0, 2, 1, 3)
        s = (q @ k.transpose(0, 1, 3, 2)) / (HEAD_DIM ** 0.5)
        p = jax.nn.softmax(s, axis=-1)
        attn = (p @ v).transpose(0, 2, 1, 3).reshape(B, NUM_TOKENS, D_MODEL)
        attn = attn @ params["ow"][l] + params["ob"][l]
        h = _layernorm(h + attn, params["ln1w"][l], params["ln1b"][l])
        ff = jax.nn.relu(h @ params["ff1w"][l] + params["ff1b"][l])
        ff = ff @ params["ff2w"][l] + params["ff2b"][l]
        h = _layernorm(h + ff, params["ln2w"][l], params["ln2b"][l])
    pooled = jnp.mean(h, axis=1)
    return pooled @ params["fcw"] + params["fcb"]


if __name__ == "__main__":
    key = jax.random.PRNGKey(0)
    k_x, k_p = jax.random.split(key)
    x = jax.random.normal(k_x, (BATCH, INPUT_DIM), dtype=jnp.float32)
    params = init_params(k_p)
    kparams = prepare_params(params)   # one-time host-side weight transform

    out = jax.jit(transformer_regressor)(x, kparams)
    out = jax.block_until_ready(out)

    ref = reference(x, params)
    assert out.shape == (BATCH, OUTPUT_DIM)
    assert jnp.allclose(out, ref, atol=2e-3, rtol=2e-3), (out, ref, jnp.max(jnp.abs(out - ref)))
    print("KERNEL_OK")
</pallas_src>

<mosaic_0001>
module attributes {stable_mosaic.version = 11 : i64} {
  func.func @transformer_regressor_kernel(%arg0: i32, %arg1: memref<1x8x128xf32, #tpu.memory_space<vmem>>, %arg2: memref<8x128xf32, #tpu.memory_space<vmem>>, %arg3: memref<32x32xf32, #tpu.memory_space<vmem>>, %arg4: memref<128x128xf32, #tpu.memory_space<vmem>>, %arg5: memref<2x128x384xf32, #tpu.memory_space<vmem>>, %arg6: memref<2x1x384xf32, #tpu.memory_space<vmem>>, %arg7: memref<2x128x128xf32, #tpu.memory_space<vmem>>, %arg8: memref<2x1x128xf32, #tpu.memory_space<vmem>>, %arg9: memref<2x1x128xf32, #tpu.memory_space<vmem>>, %arg10: memref<2x1x128xf32, #tpu.memory_space<vmem>>, %arg11: memref<2x128x256xf32, #tpu.memory_space<vmem>>, %arg12: memref<2x1x256xf32, #tpu.memory_space<vmem>>, %arg13: memref<2x256x128xf32, #tpu.memory_space<vmem>>, %arg14: memref<2x1x128xf32, #tpu.memory_space<vmem>>, %arg15: memref<2x1x128xf32, #tpu.memory_space<vmem>>, %arg16: memref<2x1x128xf32, #tpu.memory_space<vmem>>, %arg17: memref<1x128xf32, #tpu.memory_space<vmem>>, %arg18: memref<1x1xf32, #tpu.memory_space<vmem>>, %arg19: memref<1x1x1xf32, #tpu.memory_space<vmem>>) attributes {dimension_semantics = [#tpu.dimension_semantics<parallel>], iteration_bounds = array<i64: 2>, scalar_prefetch = 0 : i64, scratch_operands = 0 : i64, tpu.core_type = #tpu.core_type<tc>, window_params = [{transform_indices = @transform_0, window_bounds = array<i64: 1, 8, 128>}, {pipeline_mode = #tpu.pipeline_mode<synchronous>, transform_indices = @transform_1, window_bounds = array<i64: 8, 128>}, {pipeline_mode = #tpu.pipeline_mode<synchronous>, transform_indices = @transform_2, window_bounds = array<i64: 32, 32>}, {pipeline_mode = #tpu.pipeline_mode<synchronous>, transform_indices = @transform_3, window_bounds = array<i64: 128, 128>}, {pipeline_mode = #tpu.pipeline_mode<synchronous>, transform_indices = @transform_4, window_bounds = array<i64: 2, 128, 384>}, {pipeline_mode = #tpu.pipeline_mode<synchronous>, transform_indices = @transform_5, window_bounds = array<i64: 2, 1, 384>}, {pipeline_mode = #tpu.pipeline_mode<synchronous>, transform_indices = @transform_6, window_bounds = array<i64: 2, 128, 128>}, {pipeline_mode = #tpu.pipeline_mode<synchronous>, transform_indices = @transform_7, window_bounds = array<i64: 2, 1, 128>}, {pipeline_mode = #tpu.pipeline_mode<synchronous>, transform_indices = @transform_8, window_bounds = array<i64: 2, 1, 128>}, {pipeline_mode = #tpu.pipeline_mode<synchronous>, transform_indices = @transform_9, window_bounds = array<i64: 2, 1, 128>}, {pipeline_mode = #tpu.pipeline_mode<synchronous>, transform_indices = @transform_10, window_bounds = array<i64: 2, 128, 256>}, {pipeline_mode = #tpu.pipeline_mode<synchronous>, transform_indices = @transform_11, window_bounds = array<i64: 2, 1, 256>}, {pipeline_mode = #tpu.pipeline_mode<synchronous>, transform_indices = @transform_12, window_bounds = array<i64: 2, 256, 128>}, {pipeline_mode = #tpu.pipeline_mode<synchronous>, transform_indices = @transform_13, window_bounds = array<i64: 2, 1, 128>}, {pipeline_mode = #tpu.pipeline_mode<synchronous>, transform_indices = @transform_14, window_bounds = array<i64: 2, 1, 128>}, {pipeline_mode = #tpu.pipeline_mode<synchronous>, transform_indices = @transform_15, window_bounds = array<i64: 2, 1, 128>}, {pipeline_mode = #tpu.pipeline_mode<synchronous>, transform_indices = @transform_16, window_bounds = array<i64: 1, 128>}, {pipeline_mode = #tpu.pipeline_mode<synchronous>, transform_indices = @transform_17, window_bounds = array<i64: 1, 1>}, {transform_indices = @transform_18, window_bounds = array<i64: 1, 1, 1>}]} {
    %c0 = arith.constant 0 : index
    %c0_0 = arith.constant 0 : index
    %c0_1 = arith.constant 0 : index
    %0 = vector.load %arg1[%c0, %c0_0, %c0_1] : memref<1x8x128xf32, #tpu.memory_space<vmem>>, vector<1x8x128xf32>
    %1 = vector.shape_cast %0 : vector<1x8x128xf32> to vector<8x128xf32>
    %c0_2 = arith.constant 0 : index
    %c0_3 = arith.constant 0 : index
    %2 = vector.load %arg4[%c0_2, %c0_3] : memref<128x128xf32, #tpu.memory_space<vmem>>, vector<128x128xf32>
    %cst = arith.constant dense<0.000000e+00> : vector<8x128xf32>
    %3 = tpu.matmul %1, %2, %cst {dimension_numbers = #tpu.dot_dimension_numbers<[1], [0], [0], [1], [0, 0, 1, 1], [], []>} : vector<8x128xf32>, vector<128x128xf32>, vector<8x128xf32> -> vector<8x128xf32>
    %c0_4 = arith.constant 0 : index
    %c0_5 = arith.constant 0 : index
    %4 = vector.load %arg2[%c0_4, %c0_5] : memref<8x128xf32, #tpu.memory_space<vmem>>, vector<8x128xf32>
    %5 = arith.addf %3, %4 : vector<8x128xf32>
    %c0_6 = arith.constant 0 : index
    %c0_7 = arith.constant 0 : index
    %c0_8 = arith.constant 0 : index
    %6 = vector.load %arg5[%c0_6, %c0_7, %c0_8] : memref<2x128x384xf32, #tpu.memory_space<vmem>>, vector<1x128x384xf32>
    %7 = vector.shape_cast %6 : vector<1x128x384xf32> to vector<128x384xf32>
    %cst_9 = arith.constant dense<0.000000e+00> : vector<8x384xf32>
    %8 = tpu.matmul %5, %7, %cst_9 {dimension_numbers = #tpu.dot_dimension_numbers<[1], [0], [0], [1], [0, 0, 1, 1], [], []>} : vector<8x128xf32>, vector<128x384xf32>, vector<8x384xf32> -> vector<8x384xf32>
    %c0_10 = arith.constant 0 : index
    %c0_11 = arith.constant 0 : index
    %c0_12 = arith.constant 0 : index
    %9 = vector.load %arg6[%c0_10, %c0_11, %c0_12] : memref<2x1x384xf32, #tpu.memory_space<vmem>>, vector<1x1x384xf32>
    %10 = vector.shape_cast %9 : vector<1x1x384xf32> to vector<1x384xf32>
    %11 = vector.broadcast %10 : vector<1x384xf32> to vector<8x384xf32>
    %12 = arith.addf %8, %11 : vector<8x384xf32>
    %13 = vector.extract_strided_slice %12 {offsets = [0, 0], sizes = [8, 32], strides = [1, 1]} : vector<8x384xf32> to vector<8x32xf32>
    %14 = vector.extract_strided_slice %12 {offsets = [0, 32], sizes = [8, 32], strides = [1, 1]} : vector<8x384xf32> to vector<8x32xf32>
    %15 = vector.extract_strided_slice %12 {offsets = [0, 64], sizes = [8, 32], strides = [1, 1]} : vector<8x384xf32> to vector<8x32xf32>
    %16 = vector.extract_strided_slice %12 {offsets = [0, 96], sizes = [8, 32], strides = [1, 1]} : vector<8x384xf32> to vector<8x32xf32>
    %17 = tpu.concatenate %13, %14, %15, %16 in 0 : vector<8x32xf32>, vector<8x32xf32>, vector<8x32xf32>, vector<8x32xf32> -> vector<32x32xf32>
    %18 = vector.extract_strided_slice %12 {offsets = [0, 128], sizes = [8, 32], strides = [1, 1]} : vector<8x384xf32> to vector<8x32xf32>
    %19 = vector.extract_strided_slice %12 {offsets = [0, 160], sizes = [8, 32], strides = [1, 1]} : vector<8x384xf32> to vector<8x32xf32>
    %20 = vector.extract_strided_slice %12 {offsets = [0, 192], sizes = [8, 32], strides = [1, 1]} : vector<8x384xf32> to vector<8x32xf32>
    %21 = vector.extract_strided_slice %12 {offsets = [0, 224], sizes = [8, 32], strides = [1, 1]} : vector<8x384xf32> to vector<8x32xf32>
    %22 = tpu.concatenate %18, %19, %20, %21 in 0 : vector<8x32xf32>, vector<8x32xf32>, vector<8x32xf32>, vector<8x32xf32> -> vector<32x32xf32>
    %23 = vector.extract_strided_slice %12 {offsets = [0, 256], sizes = [8, 32], strides = [1, 1]} : vector<8x384xf32> to vector<8x32xf32>
    %24 = vector.extract_strided_slice %12 {offsets = [0, 288], sizes = [8, 32], strides = [1, 1]} : vector<8x384xf32> to vector<8x32xf32>
    %25 = vector.extract_strided_slice %12 {offsets = [0, 320], sizes = [8, 32], strides = [1, 1]} : vector<8x384xf32> to vector<8x32xf32>
    %26 = vector.extract_strided_slice %12 {offsets = [0, 352], sizes = [8, 32], strides = [1, 1]} : vector<8x384xf32> to vector<8x32xf32>
    %27 = tpu.concatenate %23, %24, %25, %26 in 0 : vector<8x32xf32>, vector<8x32xf32>, vector<8x32xf32>, vector<8x32xf32> -> vector<32x32xf32>
    %cst_13 = arith.constant dense<0.000000e+00> : vector<32x32xf32>
    %28 = tpu.matmul %17, %22, %cst_13 {dimension_numbers = #tpu.dot_dimension_numbers<[1], [1], [0], [0], [0, 0, 1, 0], [], []>} : vector<32x32xf32>, vector<32x32xf32>, vector<32x32xf32> -> vector<32x32xf32>
    %c0_14 = arith.constant 0 : index
    %c0_15 = arith.constant 0 : index
    %29 = vector.load %arg3[%c0_14, %c0_15] : memref<32x32xf32, #tpu.memory_space<vmem>>, vector<32x32xf32>
    %30 = arith.addf %28, %29 : vector<32x32xf32>
    %cst_16 = arith.constant dense<0xFF800000> : vector<32xf32>
    %31 = vector.multi_reduction <maximumf>, %30, %cst_16 [1] : vector<32x32xf32> to vector<32xf32>
    %32 = vector.shape_cast %31 : vector<32xf32> to vector<32x1xf32>
    %33 = vector.broadcast %32 : vector<32x1xf32> to vector<32x32xf32>
    %34 = arith.subf %30, %33 : vector<32x32xf32>
    %35 = math.exp %34 : vector<32x32xf32>
    %cst_17 = arith.constant dense<0.000000e+00> : vector<32xf32>
    %36 = vector.multi_reduction <add>, %35, %cst_17 [1] : vector<32x32xf32> to vector<32xf32>
    %37 = vector.shape_cast %36 : vector<32xf32> to vector<32x1xf32>
    %38 = tpu.reciprocal %37 {approx = true} : vector<32x1xf32> -> vector<32x1xf32>
    %39 = vector.broadcast %38 : vector<32x1xf32> to vector<32x32xf32>
    %40 = arith.mulf %35, %39 : vector<32x32xf32>
    %cst_18 = arith.constant dense<0.000000e+00> : vector<32x32xf32>
    %41 = tpu.matmul %40, %27, %cst_18 {dimension_numbers = #tpu.dot_dimension_numbers<[1], [0], [0], [1], [0, 0, 1, 1], [], []>} : vector<32x32xf32>, vector<32x32xf32>, vector<32x32xf32> -> vector<32x32xf32>
    %42 = vector.extract_strided_slice %41 {offsets = [0, 0], sizes = [8, 32], strides = [1, 1]} : vector<32x32xf32> to vector<8x32xf32>
    %43 = vector.extract_strided_slice %41 {offsets = [8, 0], sizes = [8, 32], strides = [1, 1]} : vector<32x32xf32> to vector<8x32xf32>
    %44 = vector.extract_strided_slice %41 {offsets = [16, 0], sizes = [8, 32], strides = [1, 1]} : vector<32x32xf32> to vector<8x32xf32>
    %45 = vector.extract_strided_slice %41 {offsets = [24, 0], sizes = [8, 32], strides = [1, 1]} : vector<32x32xf32> to vector<8x32xf32>
    %46 = tpu.concatenate %42, %43, %44, %45 in 1 : vector<8x32xf32>, vector<8x32xf32>, vector<8x32xf32>, vector<8x32xf32> -> vector<8x128xf32>
    %c0_19 = arith.constant 0 : index
    %c0_20 = arith.constant 0 : index
    %c0_21 = arith.constant 0 : index
    %47 = vector.load %arg7[%c0_19, %c0_20, %c0_21] : memref<2x128x128xf32, #tpu.memory_space<vmem>>, vector<1x128x128xf32>
    %48 = vector.shape_cast %47 : vector<1x128x128xf32> to vector<128x128xf32>
    %cst_22 = arith.constant dense<0.000000e+00> : vector<8x128xf32>
    %49 = tpu.matmul %46, %48, %cst_22 {dimension_numbers = #tpu.dot_dimension_numbers<[1], [0], [0], [1], [0, 0, 1, 1], [], []>} : vector<8x128xf32>, vector<128x128xf32>, vector<8x128xf32> -> vector<8x128xf32>
    %c0_23 = arith.constant 0 : index
    %c0_24 = arith.constant 0 : index
    %c0_25 = arith.constant 0 : index
    %50 = vector.load %arg8[%c0_23, %c0_24, %c0_25] : memref<2x1x128xf32, #tpu.memory_space<vmem>>, vector<1x1x128xf32>
    %51 = vector.shape_cast %50 : vector<1x1x128xf32> to vector<1x128xf32>
    %52 = vector.broadcast %51 : vector<1x128xf32> to vector<8x128xf32>
    %53 = arith.addf %49, %52 : vector<8x128xf32>
    %54 = arith.addf %5, %53 : vector<8x128xf32>
    %c0_26 = arith.constant 0 : index
    %c0_27 = arith.constant 0 : index
    %c0_28 = arith.constant 0 : index
    %55 = vector.load %arg9[%c0_26, %c0_27, %c0_28] : memref<2x1x128xf32, #tpu.memory_space<vmem>>, vector<1x1x128xf32>
    %56 = vector.shape_cast %55 : vector<1x1x128xf32> to vector<1x128xf32>
    %c0_29 = arith.constant 0 : index
    %c0_30 = arith.constant 0 : index
    %c0_31 = arith.constant 0 : index
    %57 = vector.load %arg10[%c0_29, %c0_30, %c0_31] : memref<2x1x128xf32, #tpu.memory_space<vmem>>, vector<1x1x128xf32>
    %58 = vector.shape_cast %57 : vector<1x1x128xf32> to vector<1x128xf32>
    %cst_32 = arith.constant dense<0.000000e+00> : vector<8xf32>
    %59 = vector.multi_reduction <add>, %54, %cst_32 [1] : vector<8x128xf32> to vector<8xf32>
    %60 = vector.shape_cast %59 : vector<8xf32> to vector<8x1xf32>
    %cst_33 = arith.constant 1.280000e+02 : f32
    %61 = vector.broadcast %cst_33 : f32 to vector<8x1xf32>
    %62 = arith.divf %60, %61 : vector<8x1xf32>
    %63 = vector.broadcast %62 : vector<8x1xf32> to vector<8x128xf32>
    %64 = arith.subf %54, %63 : vector<8x128xf32>
    %65 = arith.mulf %64, %64 : vector<8x128xf32>
    %cst_34 = arith.constant dense<0.000000e+00> : vector<8xf32>
    %66 = vector.multi_reduction <add>, %65, %cst_34 [1] : vector<8x128xf32> to vector<8xf32>
    %67 = vector.shape_cast %66 : vector<8xf32> to vector<8x1xf32>
    %cst_35 = arith.constant 1.280000e+02 : f32
    %68 = vector.broadcast %cst_35 : f32 to vector<8x1xf32>
    %69 = arith.divf %67, %68 : vector<8x1xf32>
    %cst_36 = arith.constant 9.99999974E-6 : f32
    %70 = vector.broadcast %cst_36 : f32 to vector<8x1xf32>
    %71 = arith.addf %69, %70 : vector<8x1xf32>
    %72 = math.rsqrt %71 : vector<8x1xf32>
    %73 = vector.broadcast %72 : vector<8x1xf32> to vector<8x128xf32>
    %74 = arith.mulf %64, %73 : vector<8x128xf32>
    %75 = vector.broadcast %56 : vector<1x128xf32> to vector<8x128xf32>
    %76 = arith.mulf %74, %75 : vector<8x128xf32>
    %77 = vector.broadcast %58 : vector<1x128xf32> to vector<8x128xf32>
    %78 = arith.addf %76, %77 : vector<8x128xf32>
    %c0_37 = arith.constant 0 : index
    %c0_38 = arith.constant 0 : index
    %c0_39 = arith.constant 0 : index
    %79 = vector.load %arg11[%c0_37, %c0_38, %c0_39] : memref<2x128x256xf32, #tpu.memory_space<vmem>>, vector<1x128x256xf32>
    %80 = vector.shape_cast %79 : vector<1x128x256xf32> to vector<128x256xf32>
    %cst_40 = arith.constant dense<0.000000e+00> : vector<8x256xf32>
    %81 = tpu.matmul %78, %80, %cst_40 {dimension_numbers = #tpu.dot_dimension_numbers<[1], [0], [0], [1], [0, 0, 1, 1], [], []>} : vector<8x128xf32>, vector<128x256xf32>, vector<8x256xf32> -> vector<8x256xf32>
    %c0_41 = arith.constant 0 : index
    %c0_42 = arith.constant 0 : index
    %c0_43 = arith.constant 0 : index
    %82 = vector.load %arg12[%c0_41, %c0_42, %c0_43] : memref<2x1x256xf32, #tpu.memory_space<vmem>>, vector<1x1x256xf32>
    %83 = vector.shape_cast %82 : vector<1x1x256xf32> to vector<1x256xf32>
    %84 = vector.broadcast %83 : vector<1x256xf32> to vector<8x256xf32>
    %85 = arith.addf %81, %84 : vector<8x256xf32>
    %cst_44 = arith.constant 0.000000e+00 : f32
    %86 = vector.broadcast %cst_44 : f32 to vector<8x256xf32>
    %87 = arith.maximumf %85, %86 : vector<8x256xf32>
    %c0_45 = arith.constant 0 : index
    %c0_46 = arith.constant 0 : index
    %c0_47 = arith.constant 0 : index
    %88 = vector.load %arg13[%c0_45, %c0_46, %c0_47] : memref<2x256x128xf32, #tpu.memory_space<vmem>>, vector<1x256x128xf32>
    %89 = vector.shape_cast %88 : vector<1x256x128xf32> to vector<256x128xf32>
    %cst_48 = arith.constant dense<0.000000e+00> : vector<8x128xf32>
    %90 = tpu.matmul %87, %89, %cst_48 {dimension_numbers = #tpu.dot_dimension_numbers<[1], [0], [0], [1], [0, 0, 1, 1], [], []>} : vector<8x256xf32>, vector<256x128xf32>, vector<8x128xf32> -> vector<8x128xf32>
    %c0_49 = arith.constant 0 : index
    %c0_50 = arith.constant 0 : index
    %c0_51 = arith.constant 0 : index
    %91 = vector.load %arg14[%c0_49, %c0_50, %c0_51] : memref<2x1x128xf32, #tpu.memory_space<vmem>>, vector<1x1x128xf32>
    %92 = vector.shape_cast %91 : vector<1x1x128xf32> to vector<1x128xf32>
    %93 = vector.broadcast %92 : vector<1x128xf32> to vector<8x128xf32>
    %94 = arith.addf %90, %93 : vector<8x128xf32>
    %95 = arith.addf %78, %94 : vector<8x128xf32>
    %c0_52 = arith.constant 0 : index
    %c0_53 = arith.constant 0 : index
    %c0_54 = arith.constant 0 : index
    %96 = vector.load %arg15[%c0_52, %c0_53, %c0_54] : memref<2x1x128xf32, #tpu.memory_space<vmem>>, vector<1x1x128xf32>
    %97 = vector.shape_cast %96 : vector<1x1x128xf32> to vector<1x128xf32>
    %c0_55 = arith.constant 0 : index
    %c0_56 = arith.constant 0 : index
    %c0_57 = arith.constant 0 : index
    %98 = vector.load %arg16[%c0_55, %c0_56, %c0_57] : memref<2x1x128xf32, #tpu.memory_space<vmem>>, vector<1x1x128xf32>
    %99 = vector.shape_cast %98 : vector<1x1x128xf32> to vector<1x128xf32>
    %cst_58 = arith.constant dense<0.000000e+00> : vector<8xf32>
    %100 = vector.multi_reduction <add>, %95, %cst_58 [1] : vector<8x128xf32> to vector<8xf32>
    %101 = vector.shape_cast %100 : vector<8xf32> to vector<8x1xf32>
    %cst_59 = arith.constant 1.280000e+02 : f32
    %102 = vector.broadcast %cst_59 : f32 to vector<8x1xf32>
    %103 = arith.divf %101, %102 : vector<8x1xf32>
    %104 = vector.broadcast %103 : vector<8x1xf32> to vector<8x128xf32>
    %105 = arith.subf %95, %104 : vector<8x128xf32>
    %106 = arith.mulf %105, %105 : vector<8x128xf32>
    %cst_60 = arith.constant dense<0.000000e+00> : vector<8xf32>
    %107 = vector.multi_reduction <add>, %106, %cst_60 [1] : vector<8x128xf32> to vector<8xf32>
    %108 = vector.shape_cast %107 : vector<8xf32> to vector<8x1xf32>
    %cst_61 = arith.constant 1.280000e+02 : f32
    %109 = vector.broadcast %cst_61 : f32 to vector<8x1xf32>
    %110 = arith.divf %108, %109 : vector<8x1xf32>
    %cst_62 = arith.constant 9.99999974E-6 : f32
    %111 = vector.broadcast %cst_62 : f32 to vector<8x1xf32>
    %112 = arith.addf %110, %111 : vector<8x1xf32>
    %113 = math.rsqrt %112 : vector<8x1xf32>
    %114 = vector.broadcast %113 : vector<8x1xf32> to vector<8x128xf32>
    %115 = arith.mulf %105, %114 : vector<8x128xf32>
    %116 = vector.broadcast %97 : vector<1x128xf32> to vector<8x128xf32>
    %117 = arith.mulf %115, %116 : vector<8x128xf32>
    %118 = vector.broadcast %99 : vector<1x128xf32> to vector<8x128xf32>
    %119 = arith.addf %117, %118 : vector<8x128xf32>
    %c1 = arith.constant 1 : index
    %c0_63 = arith.constant 0 : index
    %c0_64 = arith.constant 0 : index
    %120 = vector.load %arg5[%c1, %c0_63, %c0_64] : memref<2x128x384xf32, #tpu.memory_space<vmem>>, vector<1x128x384xf32>
    %121 = vector.shape_cast %120 : vector<1x128x384xf32> to vector<128x384xf32>
    %cst_65 = arith.constant dense<0.000000e+00> : vector<8x384xf32>
    %122 = tpu.matmul %119, %121, %cst_65 {dimension_numbers = #tpu.dot_dimension_numbers<[1], [0], [0], [1], [0, 0, 1, 1], [], []>} : vector<8x128xf32>, vector<128x384xf32>, vector<8x384xf32> -> vector<8x384xf32>
    %c1_66 = arith.constant 1 : index
    %c0_67 = arith.constant 0 : index
    %c0_68 = arith.constant 0 : index
    %123 = vector.load %arg6[%c1_66, %c0_67, %c0_68] : memref<2x1x384xf32, #tpu.memory_space<vmem>>, vector<1x1x384xf32>
    %124 = vector.shape_cast %123 : vector<1x1x384xf32> to vector<1x384xf32>
    %125 = vector.broadcast %124 : vector<1x384xf32> to vector<8x384xf32>
    %126 = arith.addf %122, %125 : vector<8x384xf32>
    %127 = vector.extract_strided_slice %126 {offsets = [0, 0], sizes = [8, 32], strides = [1, 1]} : vector<8x384xf32> to vector<8x32xf32>
    %128 = vector.extract_strided_slice %126 {offsets = [0, 32], sizes = [8, 32], strides = [1, 1]} : vector<8x384xf32> to vector<8x32xf32>
    %129 = vector.extract_strided_slice %126 {offsets = [0, 64], sizes = [8, 32], strides = [1, 1]} : vector<8x384xf32> to vector<8x32xf32>
    %130 = vector.extract_strided_slice %126 {offsets = [0, 96], sizes = [8, 32], strides = [1, 1]} : vector<8x384xf32> to vector<8x32xf32>
    %131 = tpu.concatenate %127, %128, %129, %130 in 0 : vector<8x32xf32>, vector<8x32xf32>, vector<8x32xf32>, vector<8x32xf32> -> vector<32x32xf32>
    %132 = vector.extract_strided_slice %126 {offsets = [0, 128], sizes = [8, 32], strides = [1, 1]} : vector<8x384xf32> to vector<8x32xf32>
    %133 = vector.extract_strided_slice %126 {offsets = [0, 160], sizes = [8, 32], strides = [1, 1]} : vector<8x384xf32> to vector<8x32xf32>
    %134 = vector.extract_strided_slice %126 {offsets = [0, 192], sizes = [8, 32], strides = [1, 1]} : vector<8x384xf32> to vector<8x32xf32>
    %135 = vector.extract_strided_slice %126 {offsets = [0, 224], sizes = [8, 32], strides = [1, 1]} : vector<8x384xf32> to vector<8x32xf32>
    %136 = tpu.concatenate %132, %133, %134, %135 in 0 : vector<8x32xf32>, vector<8x32xf32>, vector<8x32xf32>, vector<8x32xf32> -> vector<32x32xf32>
    %137 = vector.extract_strided_slice %126 {offsets = [0, 256], sizes = [8, 32], strides = [1, 1]} : vector<8x384xf32> to vector<8x32xf32>
    %138 = vector.extract_strided_slice %126 {offsets = [0, 288], sizes = [8, 32], strides = [1, 1]} : vector<8x384xf32> to vector<8x32xf32>
    %139 = vector.extract_strided_slice %126 {offsets = [0, 320], sizes = [8, 32], strides = [1, 1]} : vector<8x384xf32> to vector<8x32xf32>
    %140 = vector.extract_strided_slice %126 {offsets = [0, 352], sizes = [8, 32], strides = [1, 1]} : vector<8x384xf32> to vector<8x32xf32>
    %141 = tpu.concatenate %137, %138, %139, %140 in 0 : vector<8x32xf32>, vector<8x32xf32>, vector<8x32xf32>, vector<8x32xf32> -> vector<32x32xf32>
    %cst_69 = arith.constant dense<0.000000e+00> : vector<32x32xf32>
    %142 = tpu.matmul %131, %136, %cst_69 {dimension_numbers = #tpu.dot_dimension_numbers<[1], [1], [0], [0], [0, 0, 1, 0], [], []>} : vector<32x32xf32>, vector<32x32xf32>, vector<32x32xf32> -> vector<32x32xf32>
    %c0_70 = arith.constant 0 : index
    %c0_71 = arith.constant 0 : index
    %143 = vector.load %arg3[%c0_70, %c0_71] : memref<32x32xf32, #tpu.memory_space<vmem>>, vector<32x32xf32>
    %144 = arith.addf %142, %143 : vector<32x32xf32>
    %cst_72 = arith.constant dense<0xFF800000> : vector<32xf32>
    %145 = vector.multi_reduction <maximumf>, %144, %cst_72 [1] : vector<32x32xf32> to vector<32xf32>
    %146 = vector.shape_cast %145 : vector<32xf32> to vector<32x1xf32>
    %147 = vector.broadcast %146 : vector<32x1xf32> to vector<32x32xf32>
    %148 = arith.subf %144, %147 : vector<32x32xf32>
    %149 = math.exp %148 : vector<32x32xf32>
    %cst_73 = arith.constant dense<0.000000e+00> : vector<32xf32>
    %150 = vector.multi_reduction <add>, %149, %cst_73 [1] : vector<32x32xf32> to vector<32xf32>
    %151 = vector.shape_cast %150 : vector<32xf32> to vector<32x1xf32>
    %152 = tpu.reciprocal %151 {approx = true} : vector<32x1xf32> -> vector<32x1xf32>
    %153 = vector.broadcast %152 : vector<32x1xf32> to vector<32x32xf32>
    %154 = arith.mulf %149, %153 : vector<32x32xf32>
    %cst_74 = arith.constant dense<0.000000e+00> : vector<32x32xf32>
    %155 = tpu.matmul %154, %141, %cst_74 {dimension_numbers = #tpu.dot_dimension_numbers<[1], [0], [0], [1], [0, 0, 1, 1], [], []>} : vector<32x32xf32>, vector<32x32xf32>, vector<32x32xf32> -> vector<32x32xf32>
    %156 = vector.extract_strided_slice %155 {offsets = [0, 0], sizes = [8, 32], strides = [1, 1]} : vector<32x32xf32> to vector<8x32xf32>
    %157 = vector.extract_strided_slice %155 {offsets = [8, 0], sizes = [8, 32], strides = [1, 1]} : vector<32x32xf32> to vector<8x32xf32>
    %158 = vector.extract_strided_slice %155 {offsets = [16, 0], sizes = [8, 32], strides = [1, 1]} : vector<32x32xf32> to vector<8x32xf32>
    %159 = vector.extract_strided_slice %155 {offsets = [24, 0], sizes = [8, 32], strides = [1, 1]} : vector<32x32xf32> to vector<8x32xf32>
    %160 = tpu.concatenate %156, %157, %158, %159 in 1 : vector<8x32xf32>, vector<8x32xf32>, vector<8x32xf32>, vector<8x32xf32> -> vector<8x128xf32>
    %c1_75 = arith.constant 1 : index
    %c0_76 = arith.constant 0 : index
    %c0_77 = arith.constant 0 : index
    %161 = vector.load %arg7[%c1_75, %c0_76, %c0_77] : memref<2x128x128xf32, #tpu.memory_space<vmem>>, vector<1x128x128xf32>
    %162 = vector.shape_cast %161 : vector<1x128x128xf32> to vector<128x128xf32>
    %cst_78 = arith.constant dense<0.000000e+00> : vector<8x128xf32>
    %163 = tpu.matmul %160, %162, %cst_78 {dimension_numbers = #tpu.dot_dimension_numbers<[1], [0], [0], [1], [0, 0, 1, 1], [], []>} : vector<8x128xf32>, vector<128x128xf32>, vector<8x128xf32> -> vector<8x128xf32>
    %c1_79 = arith.constant 1 : index
    %c0_80 = arith.constant 0 : index
    %c0_81 = arith.constant 0 : index
    %164 = vector.load %arg8[%c1_79, %c0_80, %c0_81] : memref<2x1x128xf32, #tpu.memory_space<vmem>>, vector<1x1x128xf32>
    %165 = vector.shape_cast %164 : vector<1x1x128xf32> to vector<1x128xf32>
    %166 = vector.broadcast %165 : vector<1x128xf32> to vector<8x128xf32>
    %167 = arith.addf %163, %166 : vector<8x128xf32>
    %168 = arith.addf %119, %167 : vector<8x128xf32>
    %c1_82 = arith.constant 1 : index
    %c0_83 = arith.constant 0 : index
    %c0_84 = arith.constant 0 : index
    %169 = vector.load %arg9[%c1_82, %c0_83, %c0_84] : memref<2x1x128xf32, #tpu.memory_space<vmem>>, vector<1x1x128xf32>
    %170 = vector.shape_cast %169 : vector<1x1x128xf32> to vector<1x128xf32>
    %c1_85 = arith.constant 1 : index
    %c0_86 = arith.constant 0 : index
    %c0_87 = arith.constant 0 : index
    %171 = vector.load %arg10[%c1_85, %c0_86, %c0_87] : memref<2x1x128xf32, #tpu.memory_space<vmem>>, vector<1x1x128xf32>
    %172 = vector.shape_cast %171 : vector<1x1x128xf32> to vector<1x128xf32>
    %cst_88 = arith.constant dense<0.000000e+00> : vector<8xf32>
    %173 = vector.multi_reduction <add>, %168, %cst_88 [1] : vector<8x128xf32> to vector<8xf32>
    %174 = vector.shape_cast %173 : vector<8xf32> to vector<8x1xf32>
    %cst_89 = arith.constant 1.280000e+02 : f32
    %175 = vector.broadcast %cst_89 : f32 to vector<8x1xf32>
    %176 = arith.divf %174, %175 : vector<8x1xf32>
    %177 = vector.broadcast %176 : vector<8x1xf32> to vector<8x128xf32>
    %178 = arith.subf %168, %177 : vector<8x128xf32>
    %179 = arith.mulf %178, %178 : vector<8x128xf32>
    %cst_90 = arith.constant dense<0.000000e+00> : vector<8xf32>
    %180 = vector.multi_reduction <add>, %179, %cst_90 [1] : vector<8x128xf32> to vector<8xf32>
    %181 = vector.shape_cast %180 : vector<8xf32> to vector<8x1xf32>
    %cst_91 = arith.constant 1.280000e+02 : f32
    %182 = vector.broadcast %cst_91 : f32 to vector<8x1xf32>
    %183 = arith.divf %181, %182 : vector<8x1xf32>
    %cst_92 = arith.constant 9.99999974E-6 : f32
    %184 = vector.broadcast %cst_92 : f32 to vector<8x1xf32>
    %185 = arith.addf %183, %184 : vector<8x1xf32>
    %186 = math.rsqrt %185 : vector<8x1xf32>
    %187 = vector.broadcast %186 : vector<8x1xf32> to vector<8x128xf32>
    %188 = arith.mulf %178, %187 : vector<8x128xf32>
    %189 = vector.broadcast %170 : vector<1x128xf32> to vector<8x128xf32>
    %190 = arith.mulf %188, %189 : vector<8x128xf32>
    %191 = vector.broadcast %172 : vector<1x128xf32> to vector<8x128xf32>
    %192 = arith.addf %190, %191 : vector<8x128xf32>
    %c1_93 = arith.constant 1 : index
    %c0_94 = arith.constant 0 : index
    %c0_95 = arith.constant 0 : index
    %193 = vector.load %arg11[%c1_93, %c0_94, %c0_95] : memref<2x128x256xf32, #tpu.memory_space<vmem>>, vector<1x128x256xf32>
    %194 = vector.shape_cast %193 : vector<1x128x256xf32> to vector<128x256xf32>
    %cst_96 = arith.constant dense<0.000000e+00> : vector<8x256xf32>
    %195 = tpu.matmul %192, %194, %cst_96 {dimension_numbers = #tpu.dot_dimension_numbers<[1], [0], [0], [1], [0, 0, 1, 1], [], []>} : vector<8x128xf32>, vector<128x256xf32>, vector<8x256xf32> -> vector<8x256xf32>
    %c1_97 = arith.constant 1 : index
    %c0_98 = arith.constant 0 : index
    %c0_99 = arith.constant 0 : index
    %196 = vector.load %arg12[%c1_97, %c0_98, %c0_99] : memref<2x1x256xf32, #tpu.memory_space<vmem>>, vector<1x1x256xf32>
    %197 = vector.shape_cast %196 : vector<1x1x256xf32> to vector<1x256xf32>
    %198 = vector.broadcast %197 : vector<1x256xf32> to vector<8x256xf32>
    %199 = arith.addf %195, %198 : vector<8x256xf32>
    %cst_100 = arith.constant 0.000000e+00 : f32
    %200 = vector.broadcast %cst_100 : f32 to vector<8x256xf32>
    %201 = arith.maximumf %199, %200 : vector<8x256xf32>
    %c1_101 = arith.constant 1 : index
    %c0_102 = arith.constant 0 : index
    %c0_103 = arith.constant 0 : index
    %202 = vector.load %arg13[%c1_101, %c0_102, %c0_103] : memref<2x256x128xf32, #tpu.memory_space<vmem>>, vector<1x256x128xf32>
    %203 = vector.shape_cast %202 : vector<1x256x128xf32> to vector<256x128xf32>
    %cst_104 = arith.constant dense<0.000000e+00> : vector<8x128xf32>
    %204 = tpu.matmul %201, %203, %cst_104 {dimension_numbers = #tpu.dot_dimension_numbers<[1], [0], [0], [1], [0, 0, 1, 1], [], []>} : vector<8x256xf32>, vector<256x128xf32>, vector<8x128xf32> -> vector<8x128xf32>
    %c1_105 = arith.constant 1 : index
    %c0_106 = arith.constant 0 : index
    %c0_107 = arith.constant 0 : index
    %205 = vector.load %arg14[%c1_105, %c0_106, %c0_107] : memref<2x1x128xf32, #tpu.memory_space<vmem>>, vector<1x1x128xf32>
    %206 = vector.shape_cast %205 : vector<1x1x128xf32> to vector<1x128xf32>
    %207 = vector.broadcast %206 : vector<1x128xf32> to vector<8x128xf32>
    %208 = arith.addf %204, %207 : vector<8x128xf32>
    %209 = arith.addf %192, %208 : vector<8x128xf32>
    %c1_108 = arith.constant 1 : index
    %c0_109 = arith.constant 0 : index
    %c0_110 = arith.constant 0 : index
    %210 = vector.load %arg15[%c1_108, %c0_109, %c0_110] : memref<2x1x128xf32, #tpu.memory_space<vmem>>, vector<1x1x128xf32>
    %211 = vector.shape_cast %210 : vector<1x1x128xf32> to vector<1x128xf32>
    %c1_111 = arith.constant 1 : index
    %c0_112 = arith.constant 0 : index
    %c0_113 = arith.constant 0 : index
    %212 = vector.load %arg16[%c1_111, %c0_112, %c0_113] : memref<2x1x128xf32, #tpu.memory_space<vmem>>, vector<1x1x128xf32>
    %213 = vector.shape_cast %212 : vector<1x1x128xf32> to vector<1x128xf32>
    %cst_114 = arith.constant dense<0.000000e+00> : vector<8xf32>
    %214 = vector.multi_reduction <add>, %209, %cst_114 [1] : vector<8x128xf32> to vector<8xf32>
    %215 = vector.shape_cast %214 : vector<8xf32> to vector<8x1xf32>
    %cst_115 = arith.constant 1.280000e+02 : f32
    %216 = vector.broadcast %cst_115 : f32 to vector<8x1xf32>
    %217 = arith.divf %215, %216 : vector<8x1xf32>
    %218 = vector.broadcast %217 : vector<8x1xf32> to vector<8x128xf32>
    %219 = arith.subf %209, %218 : vector<8x128xf32>
    %220 = arith.mulf %219, %219 : vector<8x128xf32>
    %cst_116 = arith.constant dense<0.000000e+00> : vector<8xf32>
    %221 = vector.multi_reduction <add>, %220, %cst_116 [1] : vector<8x128xf32> to vector<8xf32>
    %222 = vector.shape_cast %221 : vector<8xf32> to vector<8x1xf32>
    %cst_117 = arith.constant 1.280000e+02 : f32
    %223 = vector.broadcast %cst_117 : f32 to vector<8x1xf32>
    %224 = arith.divf %222, %223 : vector<8x1xf32>
    %cst_118 = arith.constant 9.99999974E-6 : f32
    %225 = vector.broadcast %cst_118 : f32 to vector<8x1xf32>
    %226 = arith.addf %224, %225 : vector<8x1xf32>
    %227 = math.rsqrt %226 : vector<8x1xf32>
    %228 = vector.broadcast %227 : vector<8x1xf32> to vector<8x128xf32>
    %229 = arith.mulf %219, %228 : vector<8x128xf32>
    %230 = vector.broadcast %211 : vector<1x128xf32> to vector<8x128xf32>
    %231 = arith.mulf %229, %230 : vector<8x128xf32>
    %232 = vector.broadcast %213 : vector<1x128xf32> to vector<8x128xf32>
    %233 = arith.addf %231, %232 : vector<8x128xf32>
    %cst_119 = arith.constant dense<0.000000e+00> : vector<128xf32>
    %234 = vector.multi_reduction <add>, %233, %cst_119 [0] : vector<8x128xf32> to vector<128xf32>
    %235 = vector.shape_cast %234 : vector<128xf32> to vector<1x128xf32>
    %cst_120 = arith.constant 8.000000e+00 : f32
    %236 = vector.broadcast %cst_120 : f32 to vector<1x128xf32>
    %237 = arith.divf %235, %236 : vector<1x128xf32>
    %c0_121 = arith.constant 0 : index
    %c0_122 = arith.constant 0 : index
    %238 = vector.load %arg17[%c0_121, %c0_122] : memref<1x128xf32, #tpu.memory_space<vmem>>, vector<1x128xf32>
    %239 = arith.mulf %237, %238 : vector<1x128xf32>
    %cst_123 = arith.constant dense<0.000000e+00> : vector<1xf32>
    %240 = vector.multi_reduction <add>, %239, %cst_123 [1] : vector<1x128xf32> to vector<1xf32>
    %241 = vector.shape_cast %240 : vector<1xf32> to vector<1x1xf32>
    %c0_124 = arith.constant 0 : index
    %c0_125 = arith.constant 0 : index
    %242 = vector.load %arg18[%c0_124, %c0_125] : memref<1x1xf32, #tpu.memory_space<vmem>>, vector<1x1xf32>
    %243 = arith.addf %241, %242 : vector<1x1xf32>
    %244 = vector.shape_cast %243 : vector<1x1xf32> to vector<1x1x1xf32>
    %c0_126 = arith.constant 0 : index
    %c0_127 = arith.constant 0 : index
    %c0_128 = arith.constant 0 : index
    %245 = vector.load %arg19[%c0_126, %c0_127, %c0_128] : memref<1x1x1xf32, #tpu.memory_space<vmem>>, vector<1x1x1xf32>
    tpu.vector_store %arg19[%c0_126, %c0_127, %c0_128], %244 {strides = array<i32>} : memref<1x1x1xf32, #tpu.memory_space<vmem>>, vector<1x1x1xf32>,
    return
  }
  func.func @transform_0(%arg0: i32) -> (i32, i32, i32) {
    %c0_i32 = arith.constant 0 : i32
    %c0_i32_0 = arith.constant 0 : i32
    %c0_i32_1 = arith.constant 0 : i32
    return %arg0, %c0_i32, %c0_i32_0 : i32, i32, i32
  }
  func.func @transform_1(%arg0: i32) -> (i32, i32) {
    %c0_i32 = arith.constant 0 : i32
    %c0_i32_0 = arith.constant 0 : i32
    %c0_i32_1 = arith.constant 0 : i32
    return %c0_i32, %c0_i32_0 : i32, i32
  }
  func.func @transform_2(%arg0: i32) -> (i32, i32) {
    %c0_i32 = arith.constant 0 : i32
    %c0_i32_0 = arith.constant 0 : i32
    %c0_i32_1 = arith.constant 0 : i32
    return %c0_i32, %c0_i32_0 : i32, i32
  }
  func.func @transform_3(%arg0: i32) -> (i32, i32) {
    %c0_i32 = arith.constant 0 : i32
    %c0_i32_0 = arith.constant 0 : i32
    %c0_i32_1 = arith.constant 0 : i32
    return %c0_i32, %c0_i32_0 : i32, i32
  }
  func.func @transform_4(%arg0: i32) -> (i32, i32, i32) {
    %c0_i32 = arith.constant 0 : i32
    %c0_i32_0 = arith.constant 0 : i32
    %c0_i32_1 = arith.constant 0 : i32
    %c0_i32_2 = arith.constant 0 : i32
    return %c0_i32, %c0_i32_0, %c0_i32_1 : i32, i32, i32
  }
  func.func @transform_5(%arg0: i32) -> (i32, i32, i32) {
    %c0_i32 = arith.constant 0 : i32
    %c0_i32_0 = arith.constant 0 : i32
    %c0_i32_1 = arith.constant 0 : i32
    %c0_i32_2 = arith.constant 0 : i32
    return %c0_i32, %c0_i32_0, %c0_i32_1 : i32, i32, i32
  }
  func.func @transform_6(%arg0: i32) -> (i32, i32, i32) {
    %c0_i32 = arith.constant 0 : i32
    %c0_i32_0 = arith.constant 0 : i32
    %c0_i32_1 = arith.constant 0 : i32
    %c0_i32_2 = arith.constant 0 : i32
    return %c0_i32, %c0_i32_0, %c0_i32_1 : i32, i32, i32
  }
  func.func @transform_7(%arg0: i32) -> (i32, i32, i32) {
    %c0_i32 = arith.constant 0 : i32
    %c0_i32_0 = arith.constant 0 : i32
    %c0_i32_1 = arith.constant 0 : i32
    %c0_i32_2 = arith.constant 0 : i32
    return %c0_i32, %c0_i32_0, %c0_i32_1 : i32, i32, i32
  }
  func.func @transform_8(%arg0: i32) -> (i32, i32, i32) {
    %c0_i32 = arith.constant 0 : i32
    %c0_i32_0 = arith.constant 0 : i32
    %c0_i32_1 = arith.constant 0 : i32
    %c0_i32_2 = arith.constant 0 : i32
    return %c0_i32, %c0_i32_0, %c0_i32_1 : i32, i32, i32
  }
  func.func @transform_9(%arg0: i32) -> (i32, i32, i32) {
    %c0_i32 = arith.constant 0 : i32
    %c0_i32_0 = arith.constant 0 : i32
    %c0_i32_1 = arith.constant 0 : i32
    %c0_i32_2 = arith.constant 0 : i32
    return %c0_i32, %c0_i32_0, %c0_i32_1 : i32, i32, i32
  }
  func.func @transform_10(%arg0: i32) -> (i32, i32, i32) {
    %c0_i32 = arith.constant 0 : i32
    %c0_i32_0 = arith.constant 0 : i32
    %c0_i32_1 = arith.constant 0 : i32
    %c0_i32_2 = arith.constant 0 : i32
    return %c0_i32, %c0_i32_0, %c0_i32_1 : i32, i32, i32
  }
  func.func @transform_11(%arg0: i32) -> (i32, i32, i32) {
    %c0_i32 = arith.constant 0 : i32
    %c0_i32_0 = arith.constant 0 : i32
    %c0_i32_1 = arith.constant 0 : i32
    %c0_i32_2 = arith.constant 0 : i32
    return %c0_i32, %c0_i32_0, %c0_i32_1 : i32, i32, i32
  }
  func.func @transform_12(%arg0: i32) -> (i32, i32, i32) {
    %c0_i32 = arith.constant 0 : i32
    %c0_i32_0 = arith.constant 0 : i32
    %c0_i32_1 = arith.constant 0 : i32
    %c0_i32_2 = arith.constant 0 : i32
    return %c0_i32, %c0_i32_0, %c0_i32_1 : i32, i32, i32
  }
  func.func @transform_13(%arg0: i32) -> (i32, i32, i32) {
    %c0_i32 = arith.constant 0 : i32
    %c0_i32_0 = arith.constant 0 : i32
    %c0_i32_1 = arith.constant 0 : i32
    %c0_i32_2 = arith.constant 0 : i32
    return %c0_i32, %c0_i32_0, %c0_i32_1 : i32, i32, i32
  }
  func.func @transform_14(%arg0: i32) -> (i32, i32, i32) {
    %c0_i32 = arith.constant 0 : i32
    %c0_i32_0 = arith.constant 0 : i32
    %c0_i32_1 = arith.constant 0 : i32
    %c0_i32_2 = arith.constant 0 : i32
    return %c0_i32, %c0_i32_0, %c0_i32_1 : i32, i32, i32
  }
  func.func @transform_15(%arg0: i32) -> (i32, i32, i32) {
    %c0_i32 = arith.constant 0 : i32
    %c0_i32_0 = arith.constant 0 : i32
    %c0_i32_1 = arith.constant 0 : i32
    %c0_i32_2 = arith.constant 0 : i32
    return %c0_i32, %c0_i32_0, %c0_i32_1 : i32, i32, i32
  }
  func.func @transform_16(%arg0: i32) -> (i32, i32) {
    %c0_i32 = arith.constant 0 : i32
    %c0_i32_0 = arith.constant 0 : i32
    %c0_i32_1 = arith.constant 0 : i32
    return %c0_i32, %c0_i32_0 : i32, i32
  }
  func.func @transform_17(%arg0: i32) -> (i32, i32) {
    %c0_i32 = arith.constant 0 : i32
    %c0_i32_0 = arith.constant 0 : i32
    %c0_i32_1 = arith.constant 0 : i32
    return %c0_i32, %c0_i32_0 : i32, i32
  }
  func.func @transform_18(%arg0: i32) -> (i32, i32, i32) {
    %c0_i32 = arith.constant 0 : i32
    %c0_i32_0 = arith.constant 0 : i32
    %c0_i32_1 = arith.constant 0 : i32
    return %arg0, %c0_i32, %c0_i32_0 : i32, i32, i32
  }
}

</mosaic_0001>

<llo_original>
// kernel: transformer_regressor.1
$region0: #{transformer_regressor.1}
  #allocation0 [shape = 'u32[]', space=smem, size = 0x4, offset = 0x4, fixed_abs, tag = 'smem constant byte address 0x4 - core index']
  #allocation1 [shape = 'u32[72,128]{1,0:T(1,128)}', space=vmem, size = 0x9000, scoped, tag = 'internal scratch']
  #allocation2 [shape = 'f32[1,1]{1,0:T(1,128)S(1)}', space=vmem, size = 0x200, scoped, tag = 'scoped memory for transformer_regressor.1']
  %s0 = inlined_call_operand.vmem [shape: f32[2,8,128], index: 0, kind: input, shape index: {}]
  %s1 = inlined_call_operand.vmem [shape: f32[8,128], index: 1, kind: input, shape index: {}]
  %s2 = inlined_call_operand.vmem [shape: f32[32,32], index: 2, kind: input, shape index: {}]
  %s3 = inlined_call_operand.hbm [shape: f32[128,128], index: 3, kind: input, shape index: {}]
  %s4 = inlined_call_operand.hbm [shape: f32[2,128,384], index: 4, kind: input, shape index: {}]
  %s5 = inlined_call_operand.vmem [shape: f32[2,1,384], index: 5, kind: input, shape index: {}]
  %s6 = inlined_call_operand.hbm [shape: f32[2,128,128], index: 6, kind: input, shape index: {}]
  %s7 = inlined_call_operand.hbm [shape: f32[2,1,128], index: 7, kind: input, shape index: {}]
  %s8 = inlined_call_operand.hbm [shape: f32[2,1,128], index: 8, kind: input, shape index: {}]
  %s9 = inlined_call_operand.hbm [shape: f32[2,1,128], index: 9, kind: input, shape index: {}]
  %s10 = inlined_call_operand.hbm [shape: f32[2,128,256], index: 10, kind: input, shape index: {}]
  %s11 = inlined_call_operand.hbm [shape: f32[2,1,256], index: 11, kind: input, shape index: {}]
  %s12 = inlined_call_operand.hbm [shape: f32[2,256,128], index: 12, kind: input, shape index: {}]
  %s13 = inlined_call_operand.hbm [shape: f32[2,1,128], index: 13, kind: input, shape index: {}]
  %s14 = inlined_call_operand.hbm [shape: f32[2,1,128], index: 14, kind: input, shape index: {}]
  %s15 = inlined_call_operand.hbm [shape: f32[2,1,128], index: 15, kind: input, shape index: {}]
  %s16 = inlined_call_operand.hbm [shape: f32[1,128], index: 16, kind: input, shape index: {}]
  %s17 = inlined_call_operand.<no memory space> [shape: f32[1,1], index: 17, kind: input, shape index: {}]
  %s18 = inlined_call_operand.vmem [shape: f32[2,1,1], index: 18, kind: output, shape index: {}]
  %s19 = sld [smem:[#allocation0]]
  $region157: #{transformer_regressor.1} parent=0
    _
  %s21 = ssub.s32 1, %s19
  %s22 = scalar_select 0, %s21, %s19
  %v23 = vstv %s17
  %24 = vst [vmem:[#allocation2] sm:$0x1] %v23
  $region1: #{transformer_regressor.1} parent=0
    #allocation3 [shape = 'u8[65536]{0}', space=vmem, size = 0x10000, scoped, tag = 'input window, operand 3, single buffered']
    #allocation4 [shape = 's32[2]{0}', space=sflag, size = 0x8, scoped, tag = 'scoped memory for transformer_regressor.1']
    #allocation5 [shape = 'u8[393216]{0}', space=vmem, size = 0x60000, scoped, tag = 'input window, operand 4, single buffered']
    #allocation6 [shape = 's32[1]{0}', space=sflag, size = 0x4, scoped, tag = 'scoped memory for transformer_regressor.1']
    #allocation7 [shape = 'u8[131072]{0}', space=vmem, size = 0x20000, scoped, tag = 'input window, operand 6, single buffered']
    #allocation8 [shape = 'u8[1024]{0}', space=vmem, size = 0x400, scoped, tag = 'input window, operand 7, single buffered']
    #allocation9 [shape = 's32[1]{0}', space=sflag, size = 0x4, scoped, tag = 'scoped memory for transformer_regressor.1']
    #allocation10 [shape = 'u8[1024]{0}', space=vmem, size = 0x400, scoped, tag = 'input window, operand 8, single buffered']
    #allocation11 [shape = 'u8[1024]{0}', space=vmem, size = 0x400, scoped, tag = 'input window, operand 9, single buffered']
    #allocation12 [shape = 's32[1]{0}', space=sflag, size = 0x4, scoped, tag = 'scoped memory for transformer_regressor.1']
    #allocation13 [shape = 'u8[262144]{0}', space=vmem, size = 0x40000, scoped, tag = 'input window, operand 10, single buffered']
    #allocation14 [shape = 'u8[2048]{0}', space=vmem, size = 0x800, scoped, tag = 'input window, operand 11, single buffered']
    #allocation15 [shape = 's32[1]{0}', space=sflag, size = 0x4, scoped, tag = 'scoped memory for transformer_regressor.1']
    #allocation16 [shape = 'u8[262144]{0}', space=vmem, size = 0x40000, scoped, tag = 'input window, operand 12, single buffered']
    #allocation17 [shape = 'u8[1024]{0}', space=vmem, size = 0x400, scoped, tag = 'input window, operand 13, single buffered']
    #allocation18 [shape = 's32[1]{0}', space=sflag, size = 0x4, scoped, tag = 'scoped memory for transformer_regressor.1']
    #allocation19 [shape = 'u8[1024]{0}', space=vmem, size = 0x400, scoped, tag = 'input window, operand 14, single buffered']
    #allocation20 [shape = 'u8[1024]{0}', space=vmem, size = 0x400, scoped, tag = 'input window, operand 15, single buffered']
    #allocation21 [shape = 's32[1]{0}', space=sflag, size = 0x4, scoped, tag = 'scoped memory for transformer_regressor.1']
    #allocation22 [shape = 'u8[512]{0}', space=vmem, size = 0x400, scoped, tag = 'input window, operand 16, single buffered']
    %25 = vsyncpa [#allocation4], 0
    %26 = vsyncpa [#allocation6], 0
    %27 = vsyncpa [#allocation9], 0
    %28 = vsyncpa [#allocation12], 0
    %29 = vsyncpa [#allocation15], 0
    %30 = vsyncpa [#allocation18], 0
    %31 = vsyncpa [#allocation21], 0
    loop: start=0, step=1, limit=4
    $region2: #{transformer_regressor.1} parent=1 // loop_pre_header
      _
    $region3: #{transformer_regressor.1} parent=1 // loop_header
      %s33 = sphi 0, %s37
      %p34 = scmp.ge.s32.totalorder %s33, 4
      %s43 = sphi 0, %s45
      %s46 = sphi 0, %s43
      %s47 = sphi 0, %s46
      %s63 = sphi 0, %s47
      %s67 = sphi 0, %s67
      %s69 = sphi 0, %s67
      %s70 = sphi 0, %s69
      %s84 = sphi 0, %s70
      %s88 = sphi 0, %s88
      %s90 = sphi 0, %s88
      %s91 = sphi 0, %s90
      %s105 = sphi 0, %s91
      %s109 = sphi 0, %s109
      %s111 = sphi 0, %s109
      %s112 = sphi 0, %s111
      %s126 = sphi 0, %s112
      %s130 = sphi 0, %s130
      %s132 = sphi 0, %s130
      %s133 = sphi 0, %s132
      %s147 = sphi 0, %s133
      %s151 = sphi 0, %s151
      %s153 = sphi 0, %s151
      %s154 = sphi 0, %s153
      %s168 = sphi 0, %s154
      %s172 = sphi 0, %s172
      %s174 = sphi 0, %s172
      %s175 = sphi 0, %s174
      %s189 = sphi 0, %s175
      %s193 = sphi 0, %s193
      %s195 = sphi 0, %s193
      %s196 = sphi 0, %s195
      %s210 = sphi 0, %s196
      %s214 = sphi 0, %s214
      %s216 = sphi 0, %s214
      %s217 = sphi 0, %s216
      %s231 = sphi 0, %s217
      %s235 = sphi 0, %s235
      %s237 = sphi 0, %s235
      %s238 = sphi 0, %s237
      %s252 = sphi 0, %s238
      %s256 = sphi 0, %s256
      %s258 = sphi 0, %s256
      %s259 = sphi 0, %s258
      %s273 = sphi 0, %s259
      %s277 = sphi 0, %s277
      %s279 = sphi 0, %s277
      %s280 = sphi 0, %s279
      %s294 = sphi 0, %s280
      %s298 = sphi 0, %s298
      %s300 = sphi 0, %s298
      %s301 = sphi 0, %s300
      %s315 = sphi 0, %s301
      %s319 = sphi 0, %s319
      %s321 = sphi 0, %s319
      %s322 = sphi 0, %s321
      %s336 = sphi 0, %s322
      %s340 = sphi 0, %s340
      %s342 = sphi 0, %s340
      %s343 = sphi 0, %s342
      %s357 = sphi 0, %s343
      %s361 = sphi 0, %s361
      %s363 = sphi 0, %s361
      %s364 = sphi 0, %s363
      %s378 = sphi 0, %s364
      %s382 = sphi 0, %s382
      %s384 = sphi 0, %s382
      %s385 = sphi 0, %s384
      %s399 = sphi 0, %s385
      %s403 = sphi 0, %s403
      %s405 = sphi 0, %s403
      %s406 = sphi 0, %s405
      %s420 = sphi 0, %s406
      %s426 = sphi 0, %s428
      %s429 = sphi 0, %s426
      %s430 = sphi 0, %s429
      %s446 = sphi 0, %s430
    $region4: #{transformer_regressor.1} parent=1 // loop_header_branch
      %36 = sbr.rel (%p34) target = $region8
    $region5: #{transformer_regressor.1} parent=1 // loop_body
      %s38 = ssub.s32 %s33, 1
      %s39 = ssub.s32 %s33, 2
      %s40 = sadd.s32 %s33, 1
      %s41 = ssub.s32 %s33, %s40
      %p42 = scmp.eq.s32.totalorder %s41, 0
      %s44 = sadd.s32 %s43, 1
      %s45 = scalar_select %p42, %s43, %s44
      %p48 = pneg %p42
      %p49 = scmp.eq.s32.totalorder %s33, 1
      %p50 = por %p48, %p49
      %p51 = scmp.ne.s32.totalorder %s43, %s46
      %p52 = scmp.eq.s32.totalorder %s33, 0
      %p53 = por %p51, %p52
      %p54 = scmp.ne.s32.totalorder %s43, %s46
      %p55 = scmp.eq.s32.totalorder %s38, 1
      %p56 = por %p54, %p55
      %p57 = scmp.ne.s32.totalorder %s46, %s47
      %p58 = scmp.eq.s32.totalorder %s38, 0
      %p59 = por %p57, %p58
      %p60 = scmp.ne.s32.totalorder %s46, %s47
      %p61 = scmp.eq.s32.totalorder %s39, 1
      %p62 = por %p60, %p61
      %p64 = scmp.ne.s32.totalorder %s47, %s63
      %p65 = scmp.eq.s32.totalorder %s39, 0
      %p66 = por %p64, %p65
      %s68 = sadd.s32 %s67, 1
      %p71 = scmp.eq.s32.totalorder %s33, 1
      %p72 = scmp.ne.s32.totalorder %s67, %s69
      %p73 = scmp.eq.s32.totalorder %s33, 0
      %p74 = por %p72, %p73
      %p75 = scmp.ne.s32.totalorder %s67, %s69
      %p76 = scmp.eq.s32.totalorder %s38, 1
      %p77 = por %p75, %p76
      %p78 = scmp.ne.s32.totalorder %s69, %s70
      %p79 = scmp.eq.s32.totalorder %s38, 0
      %p80 = por %p78, %p79
      %p81 = scmp.ne.s32.totalorder %s69, %s70
      %p82 = scmp.eq.s32.totalorder %s39, 1
      %p83 = por %p81, %p82
      %p85 = scmp.ne.s32.totalorder %s70, %s84
      %p86 = scmp.eq.s32.totalorder %s39, 0
      %p87 = por %p85, %p86
      %s89 = sadd.s32 %s88, 1
      %p92 = scmp.eq.s32.totalorder %s33, 1
      %p93 = scmp.ne.s32.totalorder %s88, %s90
      %p94 = scmp.eq.s32.totalorder %s33, 0
      %p95 = por %p93, %p94
      %p96 = scmp.ne.s32.totalorder %s88, %s90
      %p97 = scmp.eq.s32.totalorder %s38, 1
      %p98 = por %p96, %p97
      %p99 = scmp.ne.s32.totalorder %s90, %s91
      %p100 = scmp.eq.s32.totalorder %s38, 0
      %p101 = por %p99, %p100
      %p102 = scmp.ne.s32.totalorder %s90, %s91
      %p103 = scmp.eq.s32.totalorder %s39, 1
      %p104 = por %p102, %p103
      %p106 = scmp.ne.s32.totalorder %s91, %s105
      %p107 = scmp.eq.s32.totalorder %s39, 0
      %p108 = por %p106, %p107
      %s110 = sadd.s32 %s109, 1
      %p113 = scmp.eq.s32.totalorder %s33, 1
      %p114 = scmp.ne.s32.totalorder %s109, %s111
      %p115 = scmp.eq.s32.totalorder %s33, 0
      %p116 = por %p114, %p115
      %p117 = scmp.ne.s32.totalorder %s109, %s111
      %p118 = scmp.eq.s32.totalorder %s38, 1
      %p119 = por %p117, %p118
      %p120 = scmp.ne.s32.totalorder %s111, %s112
      %p121 = scmp.eq.s32.totalorder %s38, 0
      %p122 = por %p120, %p121
      %p123 = scmp.ne.s32.totalorder %s111, %s112
      %p124 = scmp.eq.s32.totalorder %s39, 1
      %p125 = por %p123, %p124
      %p127 = scmp.ne.s32.totalorder %s112, %s126
      %p128 = scmp.eq.s32.totalorder %s39, 0
      %p129 = por %p127, %p128
      %s131 = sadd.s32 %s130, 1
      %p134 = scmp.eq.s32.totalorder %s33, 1
      %p135 = scmp.ne.s32.totalorder %s130, %s132
      %p136 = scmp.eq.s32.totalorder %s33, 0
      %p137 = por %p135, %p136
      %p138 = scmp.ne.s32.totalorder %s130, %s132
      %p139 = scmp.eq.s32.totalorder %s38, 1
      %p140 = por %p138, %p139
      %p141 = scmp.ne.s32.totalorder %s132, %s133
      %p142 = scmp.eq.s32.totalorder %s38, 0
      %p143 = por %p141, %p142
      %p144 = scmp.ne.s32.totalorder %s132, %s133
      %p145 = scmp.eq.s32.totalorder %s39, 1
      %p146 = por %p144, %p145
      %p148 = scmp.ne.s32.totalorder %s133, %s147
      %p149 = scmp.eq.s32.totalorder %s39, 0
      %p150 = por %p148, %p149
      %s152 = sadd.s32 %s151, 1
      %p155 = scmp.eq.s32.totalorder %s33, 1
      %p156 = scmp.ne.s32.totalorder %s151, %s153
      %p157 = scmp.eq.s32.totalorder %s33, 0
      %p158 = por %p156, %p157
      %p159 = scmp.ne.s32.totalorder %s151, %s153
      %p160 = scmp.eq.s32.totalorder %s38, 1
      %p161 = por %p159, %p160
      %p162 = scmp.ne.s32.totalorder %s153, %s154
      %p163 = scmp.eq.s32.totalorder %s38, 0
      %p164 = por %p162, %p163
      %p165 = scmp.ne.s32.totalorder %s153, %s154
      %p166 = scmp.eq.s32.totalorder %s39, 1
      %p167 = por %p165, %p166
      %p169 = scmp.ne.s32.totalorder %s154, %s168
      %p170 = scmp.eq.s32.totalorder %s39, 0
      %p171 = por %p169, %p170
      %s173 = sadd.s32 %s172, 1
      %p176 = scmp.eq.s32.totalorder %s33, 1
      %p177 = scmp.ne.s32.totalorder %s172, %s174
      %p178 = scmp.eq.s32.totalorder %s33, 0
      %p179 = por %p177, %p178
      %p180 = scmp.ne.s32.totalorder %s172, %s174
      %p181 = scmp.eq.s32.totalorder %s38, 1
      %p182 = por %p180, %p181
      %p183 = scmp.ne.s32.totalorder %s174, %s175
      %p184 = scmp.eq.s32.totalorder %s38, 0
      %p185 = por %p183, %p184
      %p186 = scmp.ne.s32.totalorder %s174, %s175
      %p187 = scmp.eq.s32.totalorder %s39, 1
      %p188 = por %p186, %p187
      %p190 = scmp.ne.s32.totalorder %s175, %s189
      %p191 = scmp.eq.s32.totalorder %s39, 0
      %p192 = por %p190, %p191
      %s194 = sadd.s32 %s193, 1
      %p197 = scmp.eq.s32.totalorder %s33, 1
      %p198 = scmp.ne.s32.totalorder %s193, %s195
      %p199 = scmp.eq.s32.totalorder %s33, 0
      %p200 = por %p198, %p199
      %p201 = scmp.ne.s32.totalorder %s193, %s195
      %p202 = scmp.eq.s32.totalorder %s38, 1
      %p203 = por %p201, %p202
      %p204 = scmp.ne.s32.totalorder %s195, %s196
      %p205 = scmp.eq.s32.totalorder %s38, 0
      %p206 = por %p204, %p205
      %p207 = scmp.ne.s32.totalorder %s195, %s196
      %p208 = scmp.eq.s32.totalorder %s39, 1
      %p209 = por %p207, %p208
      %p211 = scmp.ne.s32.totalorder %s196, %s210
      %p212 = scmp.eq.s32.totalorder %s39, 0
      %p213 = por %p211, %p212
      %s215 = sadd.s32 %s214, 1
      %p218 = scmp.eq.s32.totalorder %s33, 1
      %p219 = scmp.ne.s32.totalorder %s214, %s216
      %p220 = scmp.eq.s32.totalorder %s33, 0
      %p221 = por %p219, %p220
      %p222 = scmp.ne.s32.totalorder %s214, %s216
      %p223 = scmp.eq.s32.totalorder %s38, 1
      %p224 = por %p222, %p223
      %p225 = scmp.ne.s32.totalorder %s216, %s217
      %p226 = scmp.eq.s32.totalorder %s38, 0
      %p227 = por %p225, %p226
      %p228 = scmp.ne.s32.totalorder %s216, %s217
      %p229 = scmp.eq.s32.totalorder %s39, 1
      %p230 = por %p228, %p229
      %p232 = scmp.ne.s32.totalorder %s217, %s231
      %p233 = scmp.eq.s32.totalorder %s39, 0
      %p234 = por %p232, %p233
      %s236 = sadd.s32 %s235, 1
      %p239 = scmp.eq.s32.totalorder %s33, 1
      %p240 = scmp.ne.s32.totalorder %s235, %s237
      %p241 = scmp.eq.s32.totalorder %s33, 0
      %p242 = por %p240, %p241
      %p243 = scmp.ne.s32.totalorder %s235, %s237
      %p244 = scmp.eq.s32.totalorder %s38, 1
      %p245 = por %p243, %p244
      %p246 = scmp.ne.s32.totalorder %s237, %s238
      %p247 = scmp.eq.s32.totalorder %s38, 0
      %p248 = por %p246, %p247
      %p249 = scmp.ne.s32.totalorder %s237, %s238
      %p250 = scmp.eq.s32.totalorder %s39, 1
      %p251 = por %p249, %p250
      %p253 = scmp.ne.s32.totalorder %s238, %s252
      %p254 = scmp.eq.s32.totalorder %s39, 0
      %p255 = por %p253, %p254
      %s257 = sadd.s32 %s256, 1
      %p260 = scmp.eq.s32.totalorder %s33, 1
      %p261 = scmp.ne.s32.totalorder %s256, %s258
      %p262 = scmp.eq.s32.totalorder %s33, 0
      %p263 = por %p261, %p262
      %p264 = scmp.ne.s32.totalorder %s256, %s258
      %p265 = scmp.eq.s32.totalorder %s38, 1
      %p266 = por %p264, %p265
      %p267 = scmp.ne.s32.totalorder %s258, %s259
      %p268 = scmp.eq.s32.totalorder %s38, 0
      %p269 = por %p267, %p268
      %p270 = scmp.ne.s32.totalorder %s258, %s259
      %p271 = scmp.eq.s32.totalorder %s39, 1
      %p272 = por %p270, %p271
      %p274 = scmp.ne.s32.totalorder %s259, %s273
      %p275 = scmp.eq.s32.totalorder %s39, 0
      %p276 = por %p274, %p275
      %s278 = sadd.s32 %s277, 1
      %p281 = scmp.eq.s32.totalorder %s33, 1
      %p282 = scmp.ne.s32.totalorder %s277, %s279
      %p283 = scmp.eq.s32.totalorder %s33, 0
      %p284 = por %p282, %p283
      %p285 = scmp.ne.s32.totalorder %s277, %s279
      %p286 = scmp.eq.s32.totalorder %s38, 1
      %p287 = por %p285, %p286
      %p288 = scmp.ne.s32.totalorder %s279, %s280
      %p289 = scmp.eq.s32.totalorder %s38, 0
      %p290 = por %p288, %p289
      %p291 = scmp.ne.s32.totalorder %s279, %s280
      %p292 = scmp.eq.s32.totalorder %s39, 1
      %p293 = por %p291, %p292
      %p295 = scmp.ne.s32.totalorder %s280, %s294
      %p296 = scmp.eq.s32.totalorder %s39, 0
      %p297 = por %p295, %p296
      %s299 = sadd.s32 %s298, 1
      %p302 = scmp.eq.s32.totalorder %s33, 1
      %p303 = scmp.ne.s32.totalorder %s298, %s300
      %p304 = scmp.eq.s32.totalorder %s33, 0
      %p305 = por %p303, %p304
      %p306 = scmp.ne.s32.totalorder %s298, %s300
      %p307 = scmp.eq.s32.totalorder %s38, 1
      %p308 = por %p306, %p307
      %p309 = scmp.ne.s32.totalorder %s300, %s301
      %p310 = scmp.eq.s32.totalorder %s38, 0
      %p311 = por %p309, %p310
      %p312 = scmp.ne.s32.totalorder %s300, %s301
      %p313 = scmp.eq.s32.totalorder %s39, 1
      %p314 = por %p312, %p313
      %p316 = scmp.ne.s32.totalorder %s301, %s315
      %p317 = scmp.eq.s32.totalorder %s39, 0
      %p318 = por %p316, %p317
      %s320 = sadd.s32 %s319, 1
      %p323 = scmp.eq.s32.totalorder %s33, 1
      %p324 = scmp.ne.s32.totalorder %s319, %s321
      %p325 = scmp.eq.s32.totalorder %s33, 0
      %p326 = por %p324, %p325
      %p327 = scmp.ne.s32.totalorder %s319, %s321
      %p328 = scmp.eq.s32.totalorder %s38, 1
      %p329 = por %p327, %p328
      %p330 = scmp.ne.s32.totalorder %s321, %s322
      %p331 = scmp.eq.s32.totalorder %s38, 0
      %p332 = por %p330, %p331
      %p333 = scmp.ne.s32.totalorder %s321, %s322
      %p334 = scmp.eq.s32.totalorder %s39, 1
      %p335 = por %p333, %p334
      %p337 = scmp.ne.s32.totalorder %s322, %s336
      %p338 = scmp.eq.s32.totalorder %s39, 0
      %p339 = por %p337, %p338
      %s341 = sadd.s32 %s340, 1
      %p344 = scmp.eq.s32.totalorder %s33, 1
      %p345 = scmp.ne.s32.totalorder %s340, %s342
      %p346 = scmp.eq.s32.totalorder %s33, 0
      %p347 = por %p345, %p346
      %p348 = scmp.ne.s32.totalorder %s340, %s342
      %p349 = scmp.eq.s32.totalorder %s38, 1
      %p350 = por %p348, %p349
      %p351 = scmp.ne.s32.totalorder %s342, %s343
      %p352 = scmp.eq.s32.totalorder %s38, 0
      %p353 = por %p351, %p352
      %p354 = scmp.ne.s32.totalorder %s342, %s343
      %p355 = scmp.eq.s32.totalorder %s39, 1
      %p356 = por %p354, %p355
      %p358 = scmp.ne.s32.totalorder %s343, %s357
      %p359 = scmp.eq.s32.totalorder %s39, 0
      %p360 = por %p358, %p359
      %s362 = sadd.s32 %s361, 1
      %p365 = scmp.eq.s32.totalorder %s33, 1
      %p366 = scmp.ne.s32.totalorder %s361, %s363
      %p367 = scmp.eq.s32.totalorder %s33, 0
      %p368 = por %p366, %p367
      %p369 = scmp.ne.s32.totalorder %s361, %s363
      %p370 = scmp.eq.s32.totalorder %s38, 1
      %p371 = por %p369, %p370
      %p372 = scmp.ne.s32.totalorder %s363, %s364
      %p373 = scmp.eq.s32.totalorder %s38, 0
      %p374 = por %p372, %p373
      %p375 = scmp.ne.s32.totalorder %s363, %s364
      %p376 = scmp.eq.s32.totalorder %s39, 1
      %p377 = por %p375, %p376
      %p379 = scmp.ne.s32.totalorder %s364, %s378
      %p380 = scmp.eq.s32.totalorder %s39, 0
      %p381 = por %p379, %p380
      %s383 = sadd.s32 %s382, 1
      %p386 = scmp.eq.s32.totalorder %s33, 1
      %p387 = scmp.ne.s32.totalorder %s382, %s384
      %p388 = scmp.eq.s32.totalorder %s33, 0
      %p389 = por %p387, %p388
      %p390 = scmp.ne.s32.totalorder %s382, %s384
      %p391 = scmp.eq.s32.totalorder %s38, 1
      %p392 = por %p390, %p391
      %p393 = scmp.ne.s32.totalorder %s384, %s385
      %p394 = scmp.eq.s32.totalorder %s38, 0
      %p395 = por %p393, %p394
      %p396 = scmp.ne.s32.totalorder %s384, %s385
      %p397 = scmp.eq.s32.totalorder %s39, 1
      %p398 = por %p396, %p397
      %p400 = scmp.ne.s32.totalorder %s385, %s399
      %p401 = scmp.eq.s32.totalorder %s39, 0
      %p402 = por %p400, %p401
      %s404 = sadd.s32 %s403, 1
      %p407 = scmp.eq.s32.totalorder %s33, 1
      %p408 = scmp.ne.s32.totalorder %s403, %s405
      %p409 = scmp.eq.s32.totalorder %s33, 0
      %p410 = por %p408, %p409
      %p411 = scmp.ne.s32.totalorder %s403, %s405
      %p412 = scmp.eq.s32.totalorder %s38, 1
      %p413 = por %p411, %p412
      %p414 = scmp.ne.s32.totalorder %s405, %s406
      %p415 = scmp.eq.s32.totalorder %s38, 0
      %p416 = por %p414, %p415
      %p417 = scmp.ne.s32.totalorder %s405, %s406
      %p418 = scmp.eq.s32.totalorder %s39, 1
      %p419 = por %p417, %p418
      %p421 = scmp.ne.s32.totalorder %s406, %s420
      %p422 = scmp.eq.s32.totalorder %s39, 0
      %p423 = por %p421, %p422
      %s424 = ssub.s32 %s33, %s40
      %p425 = scmp.eq.s32.totalorder %s424, 0
      %s427 = sadd.s32 %s426, 1
      %s428 = scalar_select %p425, %s426, %s427
      %p431 = pneg %p425
      %p432 = scmp.eq.s32.totalorder %s33, 1
      %p433 = por %p431, %p432
      %p434 = scmp.ne.s32.totalorder %s426, %s429
      %p435 = scmp.eq.s32.totalorder %s33, 0
      %p436 = por %p434, %p435
      %p437 = scmp.ne.s32.totalorder %s426, %s429
      %p438 = scmp.eq.s32.totalorder %s38, 1
      %p439 = por %p437, %p438
      %p440 = scmp.ne.s32.totalorder %s429, %s430
      %p441 = scmp.eq.s32.totalorder %s38, 0
      %p442 = por %p440, %p441
      %p443 = scmp.ne.s32.totalorder %s429, %s430
      %p444 = scmp.eq.s32.totalorder %s39, 1
      %p445 = por %p443, %p444
      %p447 = scmp.ne.s32.totalorder %s430, %s446
      %p448 = scmp.eq.s32.totalorder %s39, 0
      %p449 = por %p447, %p448
      %p450 = scmp.le.s32.totalorder 1, %s33
      %p451 = scmp.lt.s32.totalorder %s33, 3
      %p452 = pnand %p450, %p451
      %p453 = pneg %p452
      // Predicated region
      $region9: #{transformer_regressor.1} parent=5 // pred_check
        _
      $region10: #{transformer_regressor.1} parent=5 // pred_check_branch
        %455 = sbr.rel (%p452) target = $region12
      $region11: #{transformer_regressor.1} parent=5 // pred_region
        %s456 = ssub.s32 %s33, 1
        // Predicated region
        $region13: #{transformer_regressor.1} parent=11 // pred_check
          %p457 = pneg %p80
        $region14: #{transformer_regressor.1} parent=11 // pred_check_branch
          %459 = sbr.rel (%p457) target = $region16
        $region15: #{transformer_regressor.1} parent=11 // pred_region
          _
        $region16: #{transformer_regressor.1} parent=11 // pred_fallthru
          _
        // Predicated region
        $region17: #{transformer_regressor.1} parent=11 // pred_check
          %p460 = pneg %p101
        $region18: #{transformer_regressor.1} parent=11 // pred_check_branch
          %462 = sbr.rel (%p460) target = $region20
        $region19: #{transformer_regressor.1} parent=11 // pred_region
          _
        $region20: #{transformer_regressor.1} parent=11 // pred_fallthru
          _
        // Predicated region
        $region21: #{transformer_regressor.1} parent=11 // pred_check
          %p463 = pneg %p122
        $region22: #{transformer_regressor.1} parent=11 // pred_check_branch
          %465 = sbr.rel (%p463) target = $region24
        $region23: #{transformer_regressor.1} parent=11 // pred_region
          %467 = vsyncadd [#allocation4], 0
          %s468 = sshll.u32 %s3, 4
          %s469 = int_to_ptr.hbm [resolvable:$true] %s468
          %s470 = sshll.u32 [#allocation3], 4
          %s471 = int_to_ptr.vmem [resolvable:$true] %s470
          %476 = dma.hbm_to_vmem [thread:$0]  %s469, 2048, %s471, [#allocation4], 128, 128, 8
        $region24: #{transformer_regressor.1} parent=11 // pred_fallthru
          _
        // Predicated region
        $region25: #{transformer_regressor.1} parent=11 // pred_check
          %p477 = pneg %p143
        $region26: #{transformer_regressor.1} parent=11 // pred_check_branch
          %479 = sbr.rel (%p477) target = $region28
        $region27: #{transformer_regressor.1} parent=11 // pred_region
          %481 = vsyncadd [#allocation6], 0
          %s482 = sshll.u32 %s4, 4
          %s483 = int_to_ptr.hbm [resolvable:$true] %s482
          %s484 = sshll.u32 [#allocation5], 4
          %s485 = int_to_ptr.vmem [resolvable:$true] %s484
          %490 = dma.hbm_to_vmem [thread:$0]  %s483, 12288, %s485, [#allocation6], 384, 384, 24
        $region28: #{transformer_regressor.1} parent=11 // pred_fallthru
          _
        // Predicated region
        $region29: #{transformer_regressor.1} parent=11 // pred_check
          %p491 = pneg %p164
        $region30: #{transformer_regressor.1} parent=11 // pred_check_branch
          %493 = sbr.rel (%p491) target = $region32
        $region31: #{transformer_regressor.1} parent=11 // pred_region
          _
        $region32: #{transformer_regressor.1} parent=11 // pred_fallthru
          _
        // Predicated region
        $region33: #{transformer_regressor.1} parent=11 // pred_check
          %p494 = pneg %p185
        $region34: #{transformer_regressor.1} parent=11 // pred_check_branch
          %496 = sbr.rel (%p494) target = $region36
        $region35: #{transformer_regressor.1} parent=11 // pred_region
          %498 = vsyncadd [#allocation6], 0
          %s499 = sshll.u32 %s6, 4
          %s500 = int_to_ptr.hbm [resolvable:$true] %s499
          %s501 = sshll.u32 [#allocation7], 4
          %s502 = int_to_ptr.vmem [resolvable:$true] %s501
          %507 = dma.hbm_to_vmem [thread:$0]  %s500, 4096, %s502, [#allocation6], 128, 128, 8
        $region36: #{transformer_regressor.1} parent=11 // pred_fallthru
          _
        // Predicated region
        $region37: #{transformer_regressor.1} parent=11 // pred_check
          %p508 = pneg %p206
        $region38: #{transformer_regressor.1} parent=11 // pred_check_branch
          %510 = sbr.rel (%p508) target = $region40
        $region39: #{transformer_regressor.1} parent=11 // pred_region
          %512 = vsyncadd [#allocation9], 0
          %s513 = sshll.u32 %s7, 4
          %s514 = int_to_ptr.hbm [resolvable:$true] %s513
          %s515 = sshll.u32 [#allocation8], 4
          %s516 = int_to_ptr.vmem [resolvable:$true] %s515
          %521 = dma.hbm_to_vmem [thread:$0]  %s514, 32, %s516, [#allocation9], 16, 16, 1
        $region40: #{transformer_regressor.1} parent=11 // pred_fallthru
          _
        // Predicated region
        $region41: #{transformer_regressor.1} parent=11 // pred_check
          %p522 = pneg %p227
        $region42: #{transformer_regressor.1} parent=11 // pred_check_branch
          %524 = sbr.rel (%p522) target = $region44
        $region43: #{transformer_regressor.1} parent=11 // pred_region
          %526 = vsyncadd [#allocation9], 0
          %s527 = sshll.u32 %s8, 4
          %s528 = int_to_ptr.hbm [resolvable:$true] %s527
          %s529 = sshll.u32 [#allocation10], 4
          %s530 = int_to_ptr.vmem [resolvable:$true] %s529
          %535 = dma.hbm_to_vmem [thread:$0]  %s528, 32, %s530, [#allocation9], 16, 16, 1
        $region44: #{transformer_regressor.1} parent=11 // pred_fallthru
          _
        // Predicated region
        $region45: #{transformer_regressor.1} parent=11 // pred_check
          %p536 = pneg %p248
        $region46: #{transformer_regressor.1} parent=11 // pred_check_branch
          %538 = sbr.rel (%p536) target = $region48
        $region47: #{transformer_regressor.1} parent=11 // pred_region
          %540 = vsyncadd [#allocation12], 0
          %s541 = sshll.u32 %s9, 4
          %s542 = int_to_ptr.hbm [resolvable:$true] %s541
          %s543 = sshll.u32 [#allocation11], 4
          %s544 = int_to_ptr.vmem [resolvable:$true] %s543
          %549 = dma.hbm_to_vmem [thread:$0]  %s542, 32, %s544, [#allocation12], 16, 16, 1
        $region48: #{transformer_regressor.1} parent=11 // pred_fallthru
          _
        // Predicated region
        $region49: #{transformer_regressor.1} parent=11 // pred_check
          %p550 = pneg %p269
        $region50: #{transformer_regressor.1} parent=11 // pred_check_branch
          %552 = sbr.rel (%p550) target = $region52
        $region51: #{transformer_regressor.1} parent=11 // pred_region
          %554 = vsyncadd [#allocation12], 0
          %s555 = sshll.u32 %s10, 4
          %s556 = int_to_ptr.hbm [resolvable:$true] %s555
          %s557 = sshll.u32 [#allocation13], 4
          %s558 = int_to_ptr.vmem [resolvable:$true] %s557
          %563 = dma.hbm_to_vmem [thread:$0]  %s556, 8192, %s558, [#allocation12], 256, 256, 16
        $region52: #{transformer_regressor.1} parent=11 // pred_fallthru
          _
        // Predicated region
        $region53: #{transformer_regressor.1} parent=11 // pred_check
          %p564 = pneg %p290
        $region54: #{transformer_regressor.1} parent=11 // pred_check_branch
          %566 = sbr.rel (%p564) target = $region56
        $region55: #{transformer_regressor.1} parent=11 // pred_region
          %568 = vsyncadd [#allocation15], 0
          %s569 = sshll.u32 %s11, 4
          %s570 = int_to_ptr.hbm [resolvable:$true] %s569
          %s571 = sshll.u32 [#allocation14], 4
          %s572 = int_to_ptr.vmem [resolvable:$true] %s571
          %577 = dma.hbm_to_vmem [thread:$0]  %s570, 64, %s572, [#allocation15], 32, 32, 2
        $region56: #{transformer_regressor.1} parent=11 // pred_fallthru
          _
        // Predicated region
        $region57: #{transformer_regressor.1} parent=11 // pred_check
          %p578 = pneg %p311
        $region58: #{transformer_regressor.1} parent=11 // pred_check_branch
          %580 = sbr.rel (%p578) target = $region60
        $region59: #{transformer_regressor.1} parent=11 // pred_region
          %582 = vsyncadd [#allocation15], 0
          %s583 = sshll.u32 %s12, 4
          %s584 = int_to_ptr.hbm [resolvable:$true] %s583
          %s585 = sshll.u32 [#allocation16], 4
          %s586 = int_to_ptr.vmem [resolvable:$true] %s585
          %591 = dma.hbm_to_vmem [thread:$0]  %s584, 8192, %s586, [#allocation15], 128, 128, 8
        $region60: #{transformer_regressor.1} parent=11 // pred_fallthru
          _
        // Predicated region
        $region61: #{transformer_regressor.1} parent=11 // pred_check
          %p592 = pneg %p332
        $region62: #{transformer_regressor.1} parent=11 // pred_check_branch
          %594 = sbr.rel (%p592) target = $region64
        $region63: #{transformer_regressor.1} parent=11 // pred_region
          %596 = vsyncadd [#allocation18], 0
          %s597 = sshll.u32 %s13, 4
          %s598 = int_to_ptr.hbm [resolvable:$true] %s597
          %s599 = sshll.u32 [#allocation17], 4
          %s600 = int_to_ptr.vmem [resolvable:$true] %s599
          %605 = dma.hbm_to_vmem [thread:$0]  %s598, 32, %s600, [#allocation18], 16, 16, 1
        $region64: #{transformer_regressor.1} parent=11 // pred_fallthru
          _
        // Predicated region
        $region65: #{transformer_regressor.1} parent=11 // pred_check
          %p606 = pneg %p353
        $region66: #{transformer_regressor.1} parent=11 // pred_check_branch
          %608 = sbr.rel (%p606) target = $region68
        $region67: #{transformer_regressor.1} parent=11 // pred_region
          %610 = vsyncadd [#allocation18], 0
          %s611 = sshll.u32 %s14, 4
          %s612 = int_to_ptr.hbm [resolvable:$true] %s611
          %s613 = sshll.u32 [#allocation19], 4
          %s614 = int_to_ptr.vmem [resolvable:$true] %s613
          %619 = dma.hbm_to_vmem [thread:$0]  %s612, 32, %s614, [#allocation18], 16, 16, 1
        $region68: #{transformer_regressor.1} parent=11 // pred_fallthru
          _
        // Predicated region
        $region69: #{transformer_regressor.1} parent=11 // pred_check
          %p620 = pneg %p374
        $region70: #{transformer_regressor.1} parent=11 // pred_check_branch
          %622 = sbr.rel (%p620) target = $region72
        $region71: #{transformer_regressor.1} parent=11 // pred_region
          %624 = vsyncadd [#allocation21], 0
          %s625 = sshll.u32 %s15, 4
          %s626 = int_to_ptr.hbm [resolvable:$true] %s625
          %s627 = sshll.u32 [#allocation20], 4
          %s628 = int_to_ptr.vmem [resolvable:$true] %s627
          %633 = dma.hbm_to_vmem [thread:$0]  %s626, 32, %s628, [#allocation21], 16, 16, 1
        $region72: #{transformer_regressor.1} parent=11 // pred_fallthru
          _
        // Predicated region
        $region73: #{transformer_regressor.1} parent=11 // pred_check
          %p634 = pneg %p395
        $region74: #{transformer_regressor.1} parent=11 // pred_check_branch
          %636 = sbr.rel (%p634) target = $region76
        $region75: #{transformer_regressor.1} parent=11 // pred_region
          %638 = vsyncadd [#allocation21], 0
          %s640 = sshll.u32 %s16, 4
          %s641 = int_to_ptr.hbm [resolvable:$true] %s640
          %s642 = sshll.u32 [#allocation22], 4
          %s643 = int_to_ptr.vmem [resolvable:$true] %s642
          %645 = dma.hbm_to_vmem [thread:$0]  %s641, 16, %s643, [#allocation21]
        $region76: #{transformer_regressor.1} parent=11 // pred_fallthru
          _
        // Predicated region
        $region77: #{transformer_regressor.1} parent=11 // pred_check
          %p646 = pneg %p416
        $region78: #{transformer_regressor.1} parent=11 // pred_check_branch
          %648 = sbr.rel (%p646) target = $region80
        $region79: #{transformer_regressor.1} parent=11 // pred_region
          _
        $region80: #{transformer_regressor.1} parent=11 // pred_fallthru
          _
      $region12: #{transformer_regressor.1} parent=5 // pred_fallthru
        _
      %p649 = scmp.lt.s32.totalorder %s33, 2
      // Predicated region
      $region81: #{transformer_regressor.1} parent=5 // pred_check
        %p650 = pneg %p649
      $region82: #{transformer_regressor.1} parent=5 // pred_check_branch
        %652 = sbr.rel (%p650) target = $region84
      $region83: #{transformer_regressor.1} parent=5 // pred_region
        // Predicated region
        $region85: #{transformer_regressor.1} parent=83 // pred_check
          %p653 = pneg %p53
        $region86: #{transformer_regressor.1} parent=83 // pred_check_branch
          %655 = sbr.rel (%p653) target = $region88
        $region87: #{transformer_regressor.1} parent=83 // pred_region
          %p656 = scmp.lt.s32.totalorder %s33, 1
          %s657 = scalar_select %p656, %s33, 1
          %s658 = smul.addr %s657, 8
          %s659 = scalar_lea.vmem %s0, %s658
        $region88: #{transformer_regressor.1} parent=83 // pred_fallthru
          _
      $region84: #{transformer_regressor.1} parent=5 // pred_fallthru
        _
      %p660 = scmp.le.s32.totalorder 1, %s33
      %p661 = scmp.lt.s32.totalorder %s33, 3
      %p662 = pnand %p660, %p661
      %p663 = pneg %p662
      // Predicated region
      $region89: #{transformer_regressor.1} parent=5 // pred_check
        _
      $region90: #{transformer_regressor.1} parent=5 // pred_check_branch
        %665 = sbr.rel (%p662) target = $region92
      $region91: #{transformer_regressor.1} parent=5 // pred_region
        %s666 = ssub.s32 %s33, 1
        // Predicated region
        $region93: #{transformer_regressor.1} parent=91 // pred_check
          %p667 = pneg %p122
        $region94: #{transformer_regressor.1} parent=91 // pred_check_branch
          %669 = sbr.rel (%p667) target = $region96
        $region95: #{transformer_regressor.1} parent=91 // pred_region
          %671 = dma.done [#allocation4], 2048
        $region96: #{transformer_regressor.1} parent=91 // pred_fallthru
          _
        // Predicated region
        $region97: #{transformer_regressor.1} parent=91 // pred_check
          %p672 = pneg %p143
        $region98: #{transformer_regressor.1} parent=91 // pred_check_branch
          %674 = sbr.rel (%p672) target = $region100
        $region99: #{transformer_regressor.1} parent=91 // pred_region
          %676 = dma.done [#allocation6], 12288
        $region100: #{transformer_regressor.1} parent=91 // pred_fallthru
          _
        // Predicated region
        $region101: #{transformer_regressor.1} parent=91 // pred_check
          %p677 = pneg %p185
        $region102: #{transformer_regressor.1} parent=91 // pred_check_branch
          %679 = sbr.rel (%p677) target = $region104
        $region103: #{transformer_regressor.1} parent=91 // pred_region
          %681 = dma.done [#allocation6], 4096
        $region104: #{transformer_regressor.1} parent=91 // pred_fallthru
          _
        // Predicated region
        $region105: #{transformer_regressor.1} parent=91 // pred_check
          %p682 = pneg %p206
        $region106: #{transformer_regressor.1} parent=91 // pred_check_branch
          %684 = sbr.rel (%p682) target = $region108
        $region107: #{transformer_regressor.1} parent=91 // pred_region
          %686 = dma.done [#allocation9], 32
        $region108: #{transformer_regressor.1} parent=91 // pred_fallthru
          _
        // Predicated region
        $region109: #{transformer_regressor.1} parent=91 // pred_check
          %p687 = pneg %p227
        $region110: #{transformer_regressor.1} parent=91 // pred_check_branch
          %689 = sbr.rel (%p687) target = $region112
        $region111: #{transformer_regressor.1} parent=91 // pred_region
          %691 = dma.done [#allocation9], 32
        $region112: #{transformer_regressor.1} parent=91 // pred_fallthru
          _
        // Predicated region
        $region113: #{transformer_regressor.1} parent=91 // pred_check
          %p692 = pneg %p248
        $region114: #{transformer_regressor.1} parent=91 // pred_check_branch
          %694 = sbr.rel (%p692) target = $region116
        $region115: #{transformer_regressor.1} parent=91 // pred_region
          %696 = dma.done [#allocation12], 32
        $region116: #{transformer_regressor.1} parent=91 // pred_fallthru
          _
        // Predicated region
        $region117: #{transformer_regressor.1} parent=91 // pred_check
          %p697 = pneg %p269
        $region118: #{transformer_regressor.1} parent=91 // pred_check_branch
          %699 = sbr.rel (%p697) target = $region120
        $region119: #{transformer_regressor.1} parent=91 // pred_region
          %701 = dma.done [#allocation12], 8192
        $region120: #{transformer_regressor.1} parent=91 // pred_fallthru
          _
        // Predicated region
        $region121: #{transformer_regressor.1} parent=91 // pred_check
          %p702 = pneg %p290
        $region122: #{transformer_regressor.1} parent=91 // pred_check_branch
          %704 = sbr.rel (%p702) target = $region124
        $region123: #{transformer_regressor.1} parent=91 // pred_region
          %706 = dma.done [#allocation15], 64
        $region124: #{transformer_regressor.1} parent=91 // pred_fallthru
          _
        // Predicated region
        $region125: #{transformer_regressor.1} parent=91 // pred_check
          %p707 = pneg %p311
        $region126: #{transformer_regressor.1} parent=91 // pred_check_branch
          %709 = sbr.rel (%p707) target = $region128
        $region127: #{transformer_regressor.1} parent=91 // pred_region
          %711 = dma.done [#allocation15], 8192
        $region128: #{transformer_regressor.1} parent=91 // pred_fallthru
          _
        // Predicated region
        $region129: #{transformer_regressor.1} parent=91 // pred_check
          %p712 = pneg %p332
        $region130: #{transformer_regressor.1} parent=91 // pred_check_branch
          %714 = sbr.rel (%p712) target = $region132
        $region131: #{transformer_regressor.1} parent=91 // pred_region
          %716 = dma.done [#allocation18], 32
        $region132: #{transformer_regressor.1} parent=91 // pred_fallthru
          _
        // Predicated region
        $region133: #{transformer_regressor.1} parent=91 // pred_check
          %p717 = pneg %p353
        $region134: #{transformer_regressor.1} parent=91 // pred_check_branch
          %719 = sbr.rel (%p717) target = $region136
        $region135: #{transformer_regressor.1} parent=91 // pred_region
          %721 = dma.done [#allocation18], 32
        $region136: #{transformer_regressor.1} parent=91 // pred_fallthru
          _
        // Predicated region
        $region137: #{transformer_regressor.1} parent=91 // pred_check
          %p722 = pneg %p374
        $region138: #{transformer_regressor.1} parent=91 // pred_check_branch
          %724 = sbr.rel (%p722) target = $region140
        $region139: #{transformer_regressor.1} parent=91 // pred_region
          %726 = dma.done [#allocation21], 32
        $region140: #{transformer_regressor.1} parent=91 // pred_fallthru
          _
        // Predicated region
        $region141: #{transformer_regressor.1} parent=91 // pred_check
          %p727 = pneg %p395
        $region142: #{transformer_regressor.1} parent=91 // pred_check_branch
          %729 = sbr.rel (%p727) target = $region144
        $region143: #{transformer_regressor.1} parent=91 // pred_region
          %731 = dma.done [#allocation21], 16
        $region144: #{transformer_regressor.1} parent=91 // pred_fallthru
          _
        %p732 = scmp.lt.s32.totalorder %s38, 1
        %s733 = scalar_select %p732, %s38, 1
        %s734 = smul.addr %s733, 8
        %s735 = scalar_lea.vmem %s0, %s734
        %p736 = pneg %p59
        %p737 = pneg %p56
        %p738 = pneg %p80
        %p739 = pneg %p77
        %p740 = pneg %p101
        %p741 = pneg %p98
        %p742 = pneg %p122
        %p743 = pneg %p119
        %p744 = pneg %p143
        %p745 = pneg %p140
        %p746 = pneg %p164
        %p747 = pneg %p161
        %p748 = pneg %p185
        %p749 = pneg %p182
        %p750 = pneg %p206
        %p751 = pneg %p203
        %p752 = pneg %p227
        %p753 = pneg %p224
        %p754 = pneg %p248
        %p755 = pneg %p245
        %p756 = pneg %p269
        %p757 = pneg %p266
        %p758 = pneg %p290
        %p759 = pneg %p287
        %p760 = pneg %p311
        %p761 = pneg %p308
        %p762 = pneg %p332
        %p763 = pneg %p329
        %p764 = pneg %p353
        %p765 = pneg %p350
        %p766 = pneg %p374
        %p767 = pneg %p371
        %p768 = pneg %p395
        %p769 = pneg %p392
        %p770 = pneg %p416
        %p771 = pneg %p413
        %p772 = pneg %p442
        %p773 = pneg %p439
        %p774 = scmp.lt.s32.totalorder %s38, 1
        %s775 = scalar_select %p774, %s38, 1
        %s776 = scalar_lea.vmem %s18, %s775
        %p777 = scmp.lt.s32.totalorder %s38, 1
        %s778 = scalar_select %p777, %s38, 1
        %s779 = smul.addr %s778, 8
        %s780 = scalar_lea.vmem %s0, %s779
        %p781 = scmp.lt.s32.totalorder %s38, 1
        %s782 = scalar_select %p781, %s38, 1
        %s783 = scalar_lea.vmem %s18, %s782
        %v784 = vld [vmem:[%s780] sm:$0xff]
        %v785 = vld [vmem:[#allocation3] sm:$0xff]
        %v786 = vld [vmem:[#allocation3 + $0x8] sm:$0xff]
        %v787 = vld [vmem:[#allocation3 + $0x10] sm:$0xff]
        %v788 = vld [vmem:[#allocation3 + $0x18] sm:$0xff]
        %v789 = vld [vmem:[#allocation3 + $0x20] sm:$0xff]
        %v790 = vld [vmem:[#allocation3 + $0x28] sm:$0xff]
        %v791 = vld [vmem:[#allocation3 + $0x30] sm:$0xff]
        %v792 = vld [vmem:[#allocation3 + $0x38] sm:$0xff]
        %v793 = vld [vmem:[#allocation3 + $0x40] sm:$0xff]
        %v794 = vld [vmem:[#allocation3 + $0x48] sm:$0xff]
        %v795 = vld [vmem:[#allocation3 + $0x50] sm:$0xff]
        %v796 = vld [vmem:[#allocation3 + $0x58] sm:$0xff]
        %v797 = vld [vmem:[#allocation3 + $0x60] sm:$0xff]
        %v798 = vld [vmem:[#allocation3 + $0x68] sm:$0xff]
        %v799 = vld [vmem:[#allocation3 + $0x70] sm:$0xff]
        %v800 = vld [vmem:[#allocation3 + $0x78] sm:$0xff]
        %v801 = vld [vmem:[%s1] sm:$0xff]
        %802 = vmatpush.msra.mxu0 %v800
        %803 = vmatpush.msra.mxu0 %v799
        %804 = vmatpush.msra.mxu0 %v798
        %805 = vmatpush.msra.mxu0 %v797
        %806 = vmatpush.msra.mxu0 %v796
        %807 = vmatpush.msra.mxu0 %v795
        %808 = vmatpush.msra.mxu0 %v794
        %809 = vmatpush.msra.mxu0 %v793
        %810 = vmatpush.msra.mxu0 %v792
        %811 = vmatpush.msra.mxu0 %v791
        %812 = vmatpush.msra.mxu0 %v790
        %813 = vmatpush.msra.mxu0 %v789
        %814 = vmatpush.msra.mxu0 %v788
        %815 = vmatpush.msra.mxu0 %v787
        %816 = vmatpush.msra.mxu0 %v786
        %817 = vmatpush.msra.mxu0 %v785
        %818 = vmatmul.f32.gmra.mxu0 %v784
        %v819 = vpop.f32.mrf.mxu0
        %v820 = vadd.f32 %v801, %v819
        %821 = vdwg.mxu0
        %v822 = vld [vmem:[#allocation5] sm:$0xff]
        %v823 = vld [vmem:[#allocation5 + $0x8] sm:$0xff]
        %v824 = vld [vmem:[#allocation5 + $0x10] sm:$0xff]
        %v825 = vld [vmem:[#allocation5 + $0x18] sm:$0xff]
        %v826 = vld [vmem:[#allocation5 + $0x20] sm:$0xff]
        %v827 = vld [vmem:[#allocation5 + $0x28] sm:$0xff]
        %v828 = vld [vmem:[#allocation5 + $0x30] sm:$0xff]
        %v829 = vld [vmem:[#allocation5 + $0x38] sm:$0xff]
        %v830 = vld [vmem:[#allocation5 + $0x40] sm:$0xff]
        %v831 = vld [vmem:[#allocation5 + $0x48] sm:$0xff]
        %v832 = vld [vmem:[#allocation5 + $0x50] sm:$0xff]
        %v833 = vld [vmem:[#allocation5 + $0x58] sm:$0xff]
        %v834 = vld [vmem:[#allocation5 + $0x60] sm:$0xff]
        %v835 = vld [vmem:[#allocation5 + $0x68] sm:$0xff]
        %v836 = vld [vmem:[#allocation5 + $0x70] sm:$0xff]
        %v837 = vld [vmem:[#allocation5 + $0x78] sm:$0xff]
        %v838 = vld [vmem:[#allocation5 + $0x80] sm:$0xff]
        %v839 = vld [vmem:[#allocation5 + $0x88] sm:$0xff]
        %v840 = vld [vmem:[#allocation5 + $0x90] sm:$0xff]
        %v841 = vld [vmem:[#allocation5 + $0x98] sm:$0xff]
        %v842 = vld [vmem:[#allocation5 + $0xa0] sm:$0xff]
        %v843 = vld [vmem:[#allocation5 + $0xa8] sm:$0xff]
        %v844 = vld [vmem:[#allocation5 + $0xb0] sm:$0xff]
        %v845 = vld [vmem:[#allocation5 + $0xb8] sm:$0xff]
        %v846 = vld [vmem:[#allocation5 + $0xc0] sm:$0xff]
        %v847 = vld [vmem:[#allocation5 + $0xc8] sm:$0xff]
        %v848 = vld [vmem:[#allocation5 + $0xd0] sm:$0xff]
        %v849 = vld [vmem:[#allocation5 + $0xd8] sm:$0xff]
        %v850 = vld [vmem:[#allocation5 + $0xe0] sm:$0xff]
        %v851 = vld [vmem:[#allocation5 + $0xe8] sm:$0xff]
        %v852 = vld [vmem:[#allocation5 + $0xf0] sm:$0xff]
        %v853 = vld [vmem:[#allocation5 + $0xf8] sm:$0xff]
        %v854 = vld [vmem:[#allocation5 + $0x100] sm:$0xff]
        %v855 = vld [vmem:[#allocation5 + $0x108] sm:$0xff]
        %v856 = vld [vmem:[#allocation5 + $0x110] sm:$0xff]
        %v857 = vld [vmem:[#allocation5 + $0x118] sm:$0xff]
        %v858 = vld [vmem:[#allocation5 + $0x120] sm:$0xff]
        %v859 = vld [vmem:[#allocation5 + $0x128] sm:$0xff]
        %v860 = vld [vmem:[#allocation5 + $0x130] sm:$0xff]
        %v861 = vld [vmem:[#allocation5 + $0x138] sm:$0xff]
        %v862 = vld [vmem:[#allocation5 + $0x140] sm:$0xff]
        %v863 = vld [vmem:[#allocation5 + $0x148] sm:$0xff]
        %v864 = vld [vmem:[#allocation5 + $0x150] sm:$0xff]
        %v865 = vld [vmem:[#allocation5 + $0x158] sm:$0xff]
        %v866 = vld [vmem:[#allocation5 + $0x160] sm:$0xff]
        %v867 = vld [vmem:[#allocation5 + $0x168] sm:$0xff]
        %v868 = vld [vmem:[#allocation5 + $0x170] sm:$0xff]
        %v869 = vld [vmem:[#allocation5 + $0x178] sm:$0xff]
        %v870 = vld [vmem:[%s5] sm:$0x7]
        %v872 = vperm.slane %v870, 0
        %v873 = vperm.slane %v870, 1
        %v874 = vperm.slane %v870, 2
        %878 = vmatpush.msra.mxu0 %v867
        %879 = vmatpush.msra.mxu0 %v864
        %880 = vmatpush.msra.mxu0 %v861
        %881 = vmatpush.msra.mxu0 %v858
        %882 = vmatpush.msra.mxu0 %v855
        %883 = vmatpush.msra.mxu0 %v852
        %884 = vmatpush.msra.mxu0 %v849
        %885 = vmatpush.msra.mxu0 %v846
        %886 = vmatpush.msra.mxu0 %v843
        %887 = vmatpush.msra.mxu0 %v840
        %888 = vmatpush.msra.mxu0 %v837
        %889 = vmatpush.msra.mxu0 %v834
        %890 = vmatpush.msra.mxu0 %v831
        %891 = vmatpush.msra.mxu0 %v828
        %892 = vmatpush.msra.mxu0 %v825
        %893 = vmatpush.msra.mxu0 %v822
        %894 = vmatmul.f32.gmra.mxu0 %v820
        %v895 = vpop.f32.mrf.mxu0
        %v896 = vadd.f32 %v872, %v895
        %897 = vdwg.mxu0
        %898 = vmatpush.msra.mxu0 %v868
        %899 = vmatpush.msra.mxu0 %v865
        %900 = vmatpush.msra.mxu0 %v862
        %901 = vmatpush.msra.mxu0 %v859
        %902 = vmatpush.msra.mxu0 %v856
        %903 = vmatpush.msra.mxu0 %v853
        %904 = vmatpush.msra.mxu0 %v850
        %905 = vmatpush.msra.mxu0 %v847
        %906 = vmatpush.msra.mxu0 %v844
        %907 = vmatpush.msra.mxu0 %v841
        %908 = vmatpush.msra.mxu0 %v838
        %909 = vmatpush.msra.mxu0 %v835
        %910 = vmatpush.msra.mxu0 %v832
        %911 = vmatpush.msra.mxu0 %v829
        %912 = vmatpush.msra.mxu0 %v826
        %913 = vmatpush.msra.mxu0 %v823
        %914 = vmatmul.f32.gmra.mxu0 %v820
        %v915 = vpop.f32.mrf.mxu0
        %v916 = vadd.f32 %v873, %v915
        %917 = vdwg.mxu0
        %918 = vmatpush.msra.mxu0 %v869
        %919 = vmatpush.msra.mxu0 %v866
        %920 = vmatpush.msra.mxu0 %v863
        %921 = vmatpush.msra.mxu0 %v860
        %922 = vmatpush.msra.mxu0 %v857
        %923 = vmatpush.msra.mxu0 %v854
        %924 = vmatpush.msra.mxu0 %v851
        %925 = vmatpush.msra.mxu0 %v848
        %926 = vmatpush.msra.mxu0 %v845
        %927 = vmatpush.msra.mxu0 %v842
        %928 = vmatpush.msra.mxu0 %v839
        %929 = vmatpush.msra.mxu0 %v836
        %930 = vmatpush.msra.mxu0 %v833
        %931 = vmatpush.msra.mxu0 %v830
        %932 = vmatpush.msra.mxu0 %v827
        %933 = vmatpush.msra.mxu0 %v824
        %934 = vmatmul.f32.gmra.mxu0 %v820
        %v935 = vpop.f32.mrf.mxu0
        %v936 = vadd.f32 %v874, %v935
        %937 = vdwg.mxu0
        %939 = vrot.lane.b32.xlu0 %v896, 96
        %v940 = vpop.permute.xlu0 %939
        %941 = vrot.lane.b32.xlu0 %v896, 64
        %v942 = vpop.permute.xlu0 %941
        %943 = vrot.lane.b32.xlu0 %v896, 32
        %v944 = vpop.permute.xlu0 %943
        %946 = vrot.lane.b32.xlu0 %v916, 96
        %v947 = vpop.permute.xlu0 %946
        %948 = vrot.lane.b32.xlu0 %v916, 64
        %v949 = vpop.permute.xlu0 %948
        %950 = vrot.lane.b32.xlu0 %v916, 32
        %v951 = vpop.permute.xlu0 %950
        %953 = vrot.lane.b32.xlu0 %v936, 96
        %v954 = vpop.permute.xlu0 %953
        %956 = vrot.lane.b32.xlu0 %v936, 64
        %v957 = vpop.permute.xlu0 %956
        %959 = vrot.lane.b32.xlu0 %v936, 32
        %v960 = vpop.permute.xlu0 %959
        %v962 = vld [vmem:[%s2] sm:$0xff]
        %v963 = vld [vmem:[%s2 + $0x8] sm:$0xff]
        %v964 = vld [vmem:[%s2 + $0x10] sm:$0xff]
        %v965 = vld [vmem:[%s2 + $0x18] sm:$0xff]
        %vm966 = vcmask 261120
        %v967 = vsel %vm966, %v896, 0
        %v969 = vsel %vm966, %v940, 0
        %v971 = vsel %vm966, %v942, 0
        %v973 = vsel %vm966, %v944, 0
        %v975 = vsel %vm966, %v916, 0
        %v977 = vsel %vm966, %v947, 0
        %v979 = vsel %vm966, %v949, 0
        %v981 = vsel %vm966, %v951, 0
        %983 = vmatpush.xpose.msra.mxu0 0.0
        %984 = vmatpush.xpose.msra.mxu0 0.0
        %985 = vmatpush.xpose.msra.mxu0 0.0
        %986 = vmatpush.xpose.msra.mxu0 0.0
        %987 = vmatpush.xpose.msra.mxu0 0.0
        %988 = vmatpush.xpose.msra.mxu0 0.0
        %989 = vmatpush.xpose.msra.mxu0 0.0
        %990 = vmatpush.xpose.msra.mxu0 0.0
        %991 = vmatpush.xpose.msra.mxu0 0.0
        %992 = vmatpush.xpose.msra.mxu0 0.0
        %993 = vmatpush.xpose.msra.mxu0 0.0
        %994 = vmatpush.xpose.msra.mxu0 0.0
        %995 = vmatpush.xpose.msra.mxu0 %v981
        %996 = vmatpush.xpose.msra.mxu0 %v979
        %997 = vmatpush.xpose.msra.mxu0 %v977
        %998 = vmatpush.xpose.msra.mxu0 %v975
        %999 = vmatmul.f32.gmra.mxu0 %v967
        %v1000 = vpop.f32.mrf.mxu0
        %v1001 = vadd.f32 %v962, %v1000
        %1002 = vmatmul.f32.gmra.mxu0 %v969
        %v1003 = vpop.f32.mrf.mxu0
        %v1004 = vadd.f32 %v963, %v1003
        %1005 = vmatmul.f32.gmra.mxu0 %v971
        %v1006 = vpop.f32.mrf.mxu0
        %v1007 = vadd.f32 %v964, %v1006
        %1008 = vmatmul.f32.gmra.mxu0 %v973
        %v1009 = vpop.f32.mrf.mxu0
        %v1010 = vadd.f32 %v965, %v1009
        %1011 = vdwg.mxu0
        %v1012 = vsel %vm966, %v1001, -inf
        %1013 = vmax.xlane.f32.xlu0 %v1012
        %v1014 = vpop.xlane.xlu0 %1013
        %v1015 = vsel %vm966, %v1004, -inf
        %1016 = vmax.xlane.f32.xlu0 %v1015
        %v1017 = vpop.xlane.xlu0 %1016
        %v1018 = vsel %vm966, %v1007, -inf
        %1019 = vmax.xlane.f32.xlu0 %v1018
        %v1020 = vpop.xlane.xlu0 %1019
        %v1021 = vsel %vm966, %v1010, -inf
        %1022 = vmax.xlane.f32.xlu0 %v1021
        %v1023 = vpop.xlane.xlu0 %1022
        %v1024 = vsub.f32 %v1001, %v1014
        %v1025 = vsub.f32 %v1004, %v1017
        %v1026 = vsub.f32 %v1007, %v1020
        %v1027 = vsub.f32 %v1010, %v1023
        %v1028 = vmul.f32 %v1024, 1.442695
        %v1029 = vpow.pop %v1028
        %v1030 = vmul.f32 %v1025, 1.442695
        %v1031 = vpow.pop %v1030
        %v1032 = vmul.f32 %v1026, 1.442695
        %v1033 = vpow.pop %v1032
        %v1034 = vmul.f32 %v1027, 1.442695
        %v1035 = vpow.pop %v1034
        %v1036 = vsel %vm966, %v1029, 0.0
        %1037 = vadd.xlane.f32.xlu0 %v1036
        %v1038 = vpop.xlane.xlu0 %1037
        %v1039 = vsel %vm966, %v1031, 0.0
        %1040 = vadd.xlane.f32.xlu0 %v1039
        %v1041 = vpop.xlane.xlu0 %1040
        %v1042 = vsel %vm966, %v1033, 0.0
        %1043 = vadd.xlane.f32.xlu0 %v1042
        %v1044 = vpop.xlane.xlu0 %1043
        %v1045 = vsel %vm966, %v1035, 0.0
        %1046 = vadd.xlane.f32.xlu0 %v1045
        %v1047 = vpop.xlane.xlu0 %1046
        %v1048 = vrcp.pop %v1038
        %v1049 = vrcp.pop %v1041
        %v1050 = vrcp.pop %v1044
        %v1051 = vrcp.pop %v1047
        %v1052 = vmul.f32 %v1029, %v1048
        %v1053 = vmul.f32 %v1031, %v1049
        %v1054 = vmul.f32 %v1033, %v1050
        %v1055 = vmul.f32 %v1035, %v1051
        %v1057 = vsel %vm966, %v1052, 0
        %v1060 = vsel %vm966, %v1053, 0
        %v1063 = vsel %vm966, %v1054, 0
        %v1066 = vsel %vm966, %v1055, 0
        %1068 = vmatpush.msra.mxu0 0.0
        %1069 = vmatpush.msra.mxu0 0.0
        %1070 = vmatpush.msra.mxu0 0.0
        %1071 = vmatpush.msra.mxu0 0.0
        %1072 = vmatpush.msra.mxu0 0.0
        %1073 = vmatpush.msra.mxu0 0.0
        %1074 = vmatpush.msra.mxu0 0.0
        %1075 = vmatpush.msra.mxu0 0.0
        %1076 = vmatpush.msra.mxu0 0.0
        %1077 = vmatpush.msra.mxu0 0.0
        %1078 = vmatpush.msra.mxu0 0.0
        %1079 = vmatpush.msra.mxu0 0.0
        %1080 = vmatpush.msra.mxu0 %v960
        %1081 = vmatpush.msra.mxu0 %v957
        %1082 = vmatpush.msra.mxu0 %v954
        %1083 = vmatpush.msra.mxu0 %v936
        %1084 = vmatmul.f32.gmra.mxu0 %v1057
        %v1085 = vpop.f32.mrf.mxu0
        %v1086 = vadd.f32 0.0, %v1085
        %1087 = vmatmul.f32.gmra.mxu0 %v1060
        %v1088 = vpop.f32.mrf.mxu0
        %v1089 = vadd.f32 0.0, %v1088
        %1090 = vmatmul.f32.gmra.mxu0 %v1063
        %v1091 = vpop.f32.mrf.mxu0
        %v1092 = vadd.f32 0.0, %v1091
        %1093 = vmatmul.f32.gmra.mxu0 %v1066
        %v1094 = vpop.f32.mrf.mxu0
        %v1095 = vadd.f32 0.0, %v1094
        %1096 = vdwg.mxu0
        %1098 = vrot.lane.b32.xlu0 %v1089, 32
        %v1099 = vpop.permute.xlu0 %1098
        %1102 = vrot.lane.b32.xlu0 %v1092, 64
        %v1103 = vpop.permute.xlu0 %1102
        %1106 = vrot.lane.b32.xlu0 %v1095, 96
        %v1107 = vpop.permute.xlu0 %1106
        %v1109 = vsel %vm966, %v1086, %v1099
        %vm1110 = vcmask 523264
        %v1111 = vsel %vm1110, %v1109, %v1103
        %vm1112 = vcmask 785408
        %v1113 = vsel %vm1112, %v1111, %v1107
        %v1114 = vld [vmem:[#allocation7] sm:$0xff]
        %v1115 = vld [vmem:[#allocation7 + $0x8] sm:$0xff]
        %v1116 = vld [vmem:[#allocation7 + $0x10] sm:$0xff]
        %v1117 = vld [vmem:[#allocation7 + $0x18] sm:$0xff]
        %v1118 = vld [vmem:[#allocation7 + $0x20] sm:$0xff]
        %v1119 = vld [vmem:[#allocation7 + $0x28] sm:$0xff]
        %v1120 = vld [vmem:[#allocation7 + $0x30] sm:$0xff]
        %v1121 = vld [vmem:[#allocation7 + $0x38] sm:$0xff]
        %v1122 = vld [vmem:[#allocation7 + $0x40] sm:$0xff]
        %v1123 = vld [vmem:[#allocation7 + $0x48] sm:$0xff]
        %v1124 = vld [vmem:[#allocation7 + $0x50] sm:$0xff]
        %v1125 = vld [vmem:[#allocation7 + $0x58] sm:$0xff]
        %v1126 = vld [vmem:[#allocation7 + $0x60] sm:$0xff]
        %v1127 = vld [vmem:[#allocation7 + $0x68] sm:$0xff]
        %v1128 = vld [vmem:[#allocation7 + $0x70] sm:$0xff]
        %v1129 = vld [vmem:[#allocation7 + $0x78] sm:$0xff]
        %v1130 = vld [vmem:[#allocation8] sm:$0x1]
        %v1132 = vperm.slane %v1130, 0
        %1134 = vmatpush.msra.mxu0 %v1129
        %1135 = vmatpush.msra.mxu0 %v1128
        %1136 = vmatpush.msra.mxu0 %v1127
        %1137 = vmatpush.msra.mxu0 %v1126
        %1138 = vmatpush.msra.mxu0 %v1125
        %1139 = vmatpush.msra.mxu0 %v1124
        %1140 = vmatpush.msra.mxu0 %v1123
        %1141 = vmatpush.msra.mxu0 %v1122
        %1142 = vmatpush.msra.mxu0 %v1121
        %1143 = vmatpush.msra.mxu0 %v1120
        %1144 = vmatpush.msra.mxu0 %v1119
        %1145 = vmatpush.msra.mxu0 %v1118
        %1146 = vmatpush.msra.mxu0 %v1117
        %1147 = vmatpush.msra.mxu0 %v1116
        %1148 = vmatpush.msra.mxu0 %v1115
        %1149 = vmatpush.msra.mxu0 %v1114
        %1150 = vmatmul.f32.gmra.mxu0 %v1113
        %v1151 = vpop.f32.mrf.mxu0
        %v1152 = vadd.f32 %v1132, %v1151
        %1153 = vdwg.mxu0
        %v1154 = vadd.f32 %v820, %v1152
        %v1155 = vld [vmem:[#allocation10] sm:$0x1]
        %v1156 = vld [vmem:[#allocation11] sm:$0x1]
        %1157 = vadd.xlane.f32.xlu0 %v1154
        %v1158 = vpop.xlane.xlu0 %1157
        %v1159 = vrcp.pop 128.0
        %v1160 = vmul.f32 128.0, %v1159
        %v1161 = vsub.f32 1.0, %v1160
        %v1162 = vmul.f32 %v1159, %v1161
        %v1163 = vadd.f32 %v1159, %v1162
        %vm1164 = vweird.f32 %v1159
        %v1165 = vsel %vm1164, %v1159, %v1163
        %v1166 = vmul.f32 %v1158, %v1165
        %v1167 = vsub.f32 %v1154, %v1166
        %v1168 = vmul.f32 %v1167, %v1167
        %1169 = vadd.xlane.f32.xlu0 %v1168
        %v1170 = vpop.xlane.xlu0 %1169
        %v1171 = vmul.f32 %v1170, %v1165
        %v1172 = vadd.f32 %v1171, 1e-05
        %v1173 = vrsqrt.pop %v1172
        %v1174 = vmul.f32 %v1173, %v1172
        %v1175 = vmul.f32 %v1174, %v1173
        %v1176 = vmul.f32 0.5, %v1175
        %v1177 = vsub.f32 1.5, %v1176
        %v1178 = vmul.f32 %v1173, %v1177
        %vm1179 = vweird.f32 %v1172
        %vm1180 = vweird.f32 %v1173
        %vm1181 = vmor %vm1179, %vm1180
        %v1182 = vsel %vm1181, %v1173, %v1178
        %v1183 = vmul.f32 %v1167, %v1182
        %v1185 = vperm.slane %v1155, 0
        %v1187 = vmul.f32 %v1183, %v1185
        %v1189 = vperm.slane %v1156, 0
        %v1191 = vadd.f32 %v1187, %v1189
        %v1192 = vld [vmem:[#allocation13] sm:$0xff]
        %v1193 = vld [vmem:[#allocation13 + $0x8] sm:$0xff]
        %v1194 = vld [vmem:[#allocation13 + $0x10] sm:$0xff]
        %v1195 = vld [vmem:[#allocation13 + $0x18] sm:$0xff]
        %v1196 = vld [vmem:[#allocation13 + $0x20] sm:$0xff]
        %v1197 = vld [vmem:[#allocation13 + $0x28] sm:$0xff]
        %v1198 = vld [vmem:[#allocation13 + $0x30] sm:$0xff]
        %v1199 = vld [vmem:[#allocation13 + $0x38] sm:$0xff]
        %v1200 = vld [vmem:[#allocation13 + $0x40] sm:$0xff]
        %v1201 = vld [vmem:[#allocation13 + $0x48] sm:$0xff]
        %v1202 = vld [vmem:[#allocation13 + $0x50] sm:$0xff]
        %v1203 = vld [vmem:[#allocation13 + $0x58] sm:$0xff]
        %v1204 = vld [vmem:[#allocation13 + $0x60] sm:$0xff]
        %v1205 = vld [vmem:[#allocation13 + $0x68] sm:$0xff]
        %v1206 = vld [vmem:[#allocation13 + $0x70] sm:$0xff]
        %v1207 = vld [vmem:[#allocation13 + $0x78] sm:$0xff]
        %v1208 = vld [vmem:[#allocation13 + $0x80] sm:$0xff]
        %v1209 = vld [vmem:[#allocation13 + $0x88] sm:$0xff]
        %v1210 = vld [vmem:[#allocation13 + $0x90] sm:$0xff]
        %v1211 = vld [vmem:[#allocation13 + $0x98] sm:$0xff]
        %v1212 = vld [vmem:[#allocation13 + $0xa0] sm:$0xff]
        %v1213 = vld [vmem:[#allocation13 + $0xa8] sm:$0xff]
        %v1214 = vld [vmem:[#allocation13 + $0xb0] sm:$0xff]
        %v1215 = vld [vmem:[#allocation13 + $0xb8] sm:$0xff]
        %v1216 = vld [vmem:[#allocation13 + $0xc0] sm:$0xff]
        %v1217 = vld [vmem:[#allocation13 + $0xc8] sm:$0xff]
        %v1218 = vld [vmem:[#allocation13 + $0xd0] sm:$0xff]
        %v1219 = vld [vmem:[#allocation13 + $0xd8] sm:$0xff]
        %v1220 = vld [vmem:[#allocation13 + $0xe0] sm:$0xff]
        %v1221 = vld [vmem:[#allocation13 + $0xe8] sm:$0xff]
        %v1222 = vld [vmem:[#allocation13 + $0xf0] sm:$0xff]
        %v1223 = vld [vmem:[#allocation13 + $0xf8] sm:$0xff]
        %v1224 = vld [vmem:[#allocation14] sm:$0x3]
        %v1226 = vperm.slane %v1224, 0
        %v1227 = vperm.slane %v1224, 1
        %1230 = vmatpush.msra.mxu0 %v1222
        %1231 = vmatpush.msra.mxu0 %v1220
        %1232 = vmatpush.msra.mxu0 %v1218
        %1233 = vmatpush.msra.mxu0 %v1216
        %1234 = vmatpush.msra.mxu0 %v1214
        %1235 = vmatpush.msra.mxu0 %v1212
        %1236 = vmatpush.msra.mxu0 %v1210
        %1237 = vmatpush.msra.mxu0 %v1208
        %1238 = vmatpush.msra.mxu0 %v1206
        %1239 = vmatpush.msra.mxu0 %v1204
        %1240 = vmatpush.msra.mxu0 %v1202
        %1241 = vmatpush.msra.mxu0 %v1200
        %1242 = vmatpush.msra.mxu0 %v1198
        %1243 = vmatpush.msra.mxu0 %v1196
        %1244 = vmatpush.msra.mxu0 %v1194
        %1245 = vmatpush.msra.mxu0 %v1192
        %1246 = vmatmul.f32.gmra.mxu0 %v1191
        %v1247 = vpop.f32.mrf.mxu0
        %v1248 = vadd.f32 %v1226, %v1247
        %1249 = vdwg.mxu0
        %1250 = vmatpush.msra.mxu0 %v1223
        %1251 = vmatpush.msra.mxu0 %v1221
        %1252 = vmatpush.msra.mxu0 %v1219
        %1253 = vmatpush.msra.mxu0 %v1217
        %1254 = vmatpush.msra.mxu0 %v1215
        %1255 = vmatpush.msra.mxu0 %v1213
        %1256 = vmatpush.msra.mxu0 %v1211
        %1257 = vmatpush.msra.mxu0 %v1209
        %1258 = vmatpush.msra.mxu0 %v1207
        %1259 = vmatpush.msra.mxu0 %v1205
        %1260 = vmatpush.msra.mxu0 %v1203
        %1261 = vmatpush.msra.mxu0 %v1201
        %1262 = vmatpush.msra.mxu0 %v1199
        %1263 = vmatpush.msra.mxu0 %v1197
        %1264 = vmatpush.msra.mxu0 %v1195
        %1265 = vmatpush.msra.mxu0 %v1193
        %1266 = vmatmul.f32.gmra.mxu0 %v1191
        %v1267 = vpop.f32.mrf.mxu0
        %v1268 = vadd.f32 %v1227, %v1267
        %1269 = vdwg.mxu0
        %v1270 = vmax.f32 %v1248, 0.0
        %v1271 = vmax.f32 %v1268, 0.0
        %v1272 = vld [vmem:[#allocation16] sm:$0xff]
        %v1273 = vld [vmem:[#allocation16 + $0x8] sm:$0xff]
        %v1274 = vld [vmem:[#allocation16 + $0x10] sm:$0xff]
        %v1275 = vld [vmem:[#allocation16 + $0x18] sm:$0xff]
        %v1276 = vld [vmem:[#allocation16 + $0x20] sm:$0xff]
        %v1277 = vld [vmem:[#allocation16 + $0x28] sm:$0xff]
        %v1278 = vld [vmem:[#allocation16 + $0x30] sm:$0xff]
        %v1279 = vld [vmem:[#allocation16 + $0x38] sm:$0xff]
        %v1280 = vld [vmem:[#allocation16 + $0x40] sm:$0xff]
        %v1281 = vld [vmem:[#allocation16 + $0x48] sm:$0xff]
        %v1282 = vld [vmem:[#allocation16 + $0x50] sm:$0xff]
        %v1283 = vld [vmem:[#allocation16 + $0x58] sm:$0xff]
        %v1284 = vld [vmem:[#allocation16 + $0x60] sm:$0xff]
        %v1285 = vld [vmem:[#allocation16 + $0x68] sm:$0xff]
        %v1286 = vld [vmem:[#allocation16 + $0x70] sm:$0xff]
        %v1287 = vld [vmem:[#allocation16 + $0x78] sm:$0xff]
        %v1288 = vld [vmem:[#allocation16 + $0x80] sm:$0xff]
        %v1289 = vld [vmem:[#allocation16 + $0x88] sm:$0xff]
        %v1290 = vld [vmem:[#allocation16 + $0x90] sm:$0xff]
        %v1291 = vld [vmem:[#allocation16 + $0x98] sm:$0xff]
        %v1292 = vld [vmem:[#allocation16 + $0xa0] sm:$0xff]
        %v1293 = vld [vmem:[#allocation16 + $0xa8] sm:$0xff]
        %v1294 = vld [vmem:[#allocation16 + $0xb0] sm:$0xff]
        %v1295 = vld [vmem:[#allocation16 + $0xb8] sm:$0xff]
        %v1296 = vld [vmem:[#allocation16 + $0xc0] sm:$0xff]
        %v1297 = vld [vmem:[#allocation16 + $0xc8] sm:$0xff]
        %v1298 = vld [vmem:[#allocation16 + $0xd0] sm:$0xff]
        %v1299 = vld [vmem:[#allocation16 + $0xd8] sm:$0xff]
        %v1300 = vld [vmem:[#allocation16 + $0xe0] sm:$0xff]
        %v1301 = vld [vmem:[#allocation16 + $0xe8] sm:$0xff]
        %v1302 = vld [vmem:[#allocation16 + $0xf0] sm:$0xff]
        %v1303 = vld [vmem:[#allocation16 + $0xf8] sm:$0xff]
        %v1304 = vld [vmem:[#allocation17] sm:$0x1]
        %v1306 = vperm.slane %v1304, 0
        %1308 = vmatpush.msra.mxu0 %v1287
        %1309 = vmatpush.msra.mxu0 %v1286
        %1310 = vmatpush.msra.mxu0 %v1285
        %1311 = vmatpush.msra.mxu0 %v1284
        %1312 = vmatpush.msra.mxu0 %v1283
        %1313 = vmatpush.msra.mxu0 %v1282
        %1314 = vmatpush.msra.mxu0 %v1281
        %1315 = vmatpush.msra.mxu0 %v1280
        %1316 = vmatpush.msra.mxu0 %v1279
        %1317 = vmatpush.msra.mxu0 %v1278
        %1318 = vmatpush.msra.mxu0 %v1277
        %1319 = vmatpush.msra.mxu0 %v1276
        %1320 = vmatpush.msra.mxu0 %v1275
        %1321 = vmatpush.msra.mxu0 %v1274
        %1322 = vmatpush.msra.mxu0 %v1273
        %1323 = vmatpush.msra.mxu0 %v1272
        %1324 = vmatmul.f32.gmra.mxu0 %v1270
        %v1325 = vpop.f32.mrf.mxu0
        %v1326 = vadd.f32 %v1306, %v1325
        %1327 = vdwg.mxu0
        %1328 = vmatpush.msra.mxu0 %v1303
        %1329 = vmatpush.msra.mxu0 %v1302
        %1330 = vmatpush.msra.mxu0 %v1301
        %1331 = vmatpush.msra.mxu0 %v1300
        %1332 = vmatpush.msra.mxu0 %v1299
        %1333 = vmatpush.msra.mxu0 %v1298
        %1334 = vmatpush.msra.mxu0 %v1297
        %1335 = vmatpush.msra.mxu0 %v1296
        %1336 = vmatpush.msra.mxu0 %v1295
        %1337 = vmatpush.msra.mxu0 %v1294
        %1338 = vmatpush.msra.mxu0 %v1293
        %1339 = vmatpush.msra.mxu0 %v1292
        %1340 = vmatpush.msra.mxu0 %v1291
        %1341 = vmatpush.msra.mxu0 %v1290
        %1342 = vmatpush.msra.mxu0 %v1289
        %1343 = vmatpush.msra.mxu0 %v1288
        %1344 = vmatmul.f32.gmra.mxu0 %v1271
        %v1345 = vpop.f32.mrf.mxu0
        %v1346 = vadd.f32 %v1326, %v1345
        %1347 = vdwg.mxu0
        %v1348 = vadd.f32 %v1191, %v1346
        %v1349 = vld [vmem:[#allocation19] sm:$0x1]
        %v1350 = vld [vmem:[#allocation20] sm:$0x1]
        %1351 = vadd.xlane.f32.xlu0 %v1348
        %v1352 = vpop.xlane.xlu0 %1351
        %v1353 = vmul.f32 %v1352, %v1165
        %v1354 = vsub.f32 %v1348, %v1353
        %v1355 = vmul.f32 %v1354, %v1354
        %1356 = vadd.xlane.f32.xlu0 %v1355
        %v1357 = vpop.xlane.xlu0 %1356
        %v1358 = vmul.f32 %v1357, %v1165
        %v1359 = vadd.f32 %v1358, 1e-05
        %v1360 = vrsqrt.pop %v1359
        %v1361 = vmul.f32 %v1360, %v1359
        %v1362 = vmul.f32 %v1361, %v1360
        %v1363 = vmul.f32 0.5, %v1362
        %v1364 = vsub.f32 1.5, %v1363
        %v1365 = vmul.f32 %v1360, %v1364
        %vm1366 = vweird.f32 %v1359
        %vm1367 = vweird.f32 %v1360
        %vm1368 = vmor %vm1366, %vm1367
        %v1369 = vsel %vm1368, %v1360, %v1365
        %v1370 = vmul.f32 %v1354, %v1369
        %v1372 = vperm.slane %v1349, 0
        %v1374 = vmul.f32 %v1370, %v1372
        %v1376 = vperm.slane %v1350, 0
        %v1378 = vadd.f32 %v1374, %v1376
        %s1379 = scalar_lea.vmem [#allocation5], 384
        %v1380 = vld [vmem:[%s1379] sm:$0xff]
        %v1381 = vld [vmem:[%s1379 + $0x8] sm:$0xff]
        %v1382 = vld [vmem:[%s1379 + $0x10] sm:$0xff]
        %v1383 = vld [vmem:[%s1379 + $0x18] sm:$0xff]
        %v1384 = vld [vmem:[%s1379 + $0x20] sm:$0xff]
        %v1385 = vld [vmem:[%s1379 + $0x28] sm:$0xff]
        %v1386 = vld [vmem:[%s1379 + $0x30] sm:$0xff]
        %v1387 = vld [vmem:[%s1379 + $0x38] sm:$0xff]
        %v1388 = vld [vmem:[%s1379 + $0x40] sm:$0xff]
        %v1389 = vld [vmem:[%s1379 + $0x48] sm:$0xff]
        %v1390 = vld [vmem:[%s1379 + $0x50] sm:$0xff]
        %v1391 = vld [vmem:[%s1379 + $0x58] sm:$0xff]
        %v1392 = vld [vmem:[%s1379 + $0x60] sm:$0xff]
        %v1393 = vld [vmem:[%s1379 + $0x68] sm:$0xff]
        %v1394 = vld [vmem:[%s1379 + $0x70] sm:$0xff]
        %v1395 = vld [vmem:[%s1379 + $0x78] sm:$0xff]
        %v1396 = vld [vmem:[%s1379 + $0x80] sm:$0xff]
        %v1397 = vld [vmem:[%s1379 + $0x88] sm:$0xff]
        %v1398 = vld [vmem:[%s1379 + $0x90] sm:$0xff]
        %v1399 = vld [vmem:[%s1379 + $0x98] sm:$0xff]
        %v1400 = vld [vmem:[%s1379 + $0xa0] sm:$0xff]
        %v1401 = vld [vmem:[%s1379 + $0xa8] sm:$0xff]
        %v1402 = vld [vmem:[%s1379 + $0xb0] sm:$0xff]
        %v1403 = vld [vmem:[%s1379 + $0xb8] sm:$0xff]
        %v1404 = vld [vmem:[%s1379 + $0xc0] sm:$0xff]
        %v1405 = vld [vmem:[%s1379 + $0xc8] sm:$0xff]
        %v1406 = vld [vmem:[%s1379 + $0xd0] sm:$0xff]
        %v1407 = vld [vmem:[%s1379 + $0xd8] sm:$0xff]
        %v1408 = vld [vmem:[%s1379 + $0xe0] sm:$0xff]
        %v1409 = vld [vmem:[%s1379 + $0xe8] sm:$0xff]
        %v1410 = vld [vmem:[%s1379 + $0xf0] sm:$0xff]
        %v1411 = vld [vmem:[%s1379 + $0xf8] sm:$0xff]
        %v1412 = vld [vmem:[%s1379 + $0x100] sm:$0xff]
        %v1413 = vld [vmem:[%s1379 + $0x108] sm:$0xff]
        %v1414 = vld [vmem:[%s1379 + $0x110] sm:$0xff]
        %v1415 = vld [vmem:[%s1379 + $0x118] sm:$0xff]
        %v1416 = vld [vmem:[%s1379 + $0x120] sm:$0xff]
        %v1417 = vld [vmem:[%s1379 + $0x128] sm:$0xff]
        %v1418 = vld [vmem:[%s1379 + $0x130] sm:$0xff]
        %v1419 = vld [vmem:[%s1379 + $0x138] sm:$0xff]
        %v1420 = vld [vmem:[%s1379 + $0x140] sm:$0xff]
        %v1421 = vld [vmem:[%s1379 + $0x148] sm:$0xff]
        %v1422 = vld [vmem:[%s1379 + $0x150] sm:$0xff]
        %v1423 = vld [vmem:[%s1379 + $0x158] sm:$0xff]
        %v1424 = vld [vmem:[%s1379 + $0x160] sm:$0xff]
        %v1425 = vld [vmem:[%s1379 + $0x168] sm:$0xff]
        %v1426 = vld [vmem:[%s1379 + $0x170] sm:$0xff]
        %v1427 = vld [vmem:[%s1379 + $0x178] sm:$0xff]
        %s1428 = scalar_lea.vmem %s5, 3
        %v1429 = vld [vmem:[%s1428] sm:$0x7]
        %v1431 = vperm.slane %v1429, 0
        %v1432 = vperm.slane %v1429, 1
        %v1433 = vperm.slane %v1429, 2
        %1437 = vmatpush.msra.mxu0 %v1425
        %1438 = vmatpush.msra.mxu0 %v1422
        %1439 = vmatpush.msra.mxu0 %v1419
        %1440 = vmatpush.msra.mxu0 %v1416
        %1441 = vmatpush.msra.mxu0 %v1413
        %1442 = vmatpush.msra.mxu0 %v1410
        %1443 = vmatpush.msra.mxu0 %v1407
        %1444 = vmatpush.msra.mxu0 %v1404
        %1445 = vmatpush.msra.mxu0 %v1401
        %1446 = vmatpush.msra.mxu0 %v1398
        %1447 = vmatpush.msra.mxu0 %v1395
        %1448 = vmatpush.msra.mxu0 %v1392
        %1449 = vmatpush.msra.mxu0 %v1389
        %1450 = vmatpush.msra.mxu0 %v1386
        %1451 = vmatpush.msra.mxu0 %v1383
        %1452 = vmatpush.msra.mxu0 %v1380
        %1453 = vmatmul.f32.gmra.mxu0 %v1378
        %v1454 = vpop.f32.mrf.mxu0
        %v1455 = vadd.f32 %v1431, %v1454
        %1456 = vdwg.mxu0
        %1457 = vmatpush.msra.mxu0 %v1426
        %1458 = vmatpush.msra.mxu0 %v1423
        %1459 = vmatpush.msra.mxu0 %v1420
        %1460 = vmatpush.msra.mxu0 %v1417
        %1461 = vmatpush.msra.mxu0 %v1414
        %1462 = vmatpush.msra.mxu0 %v1411
        %1463 = vmatpush.msra.mxu0 %v1408
        %1464 = vmatpush.msra.mxu0 %v1405
        %1465 = vmatpush.msra.mxu0 %v1402
        %1466 = vmatpush.msra.mxu0 %v1399
        %1467 = vmatpush.msra.mxu0 %v1396
        %1468 = vmatpush.msra.mxu0 %v1393
        %1469 = vmatpush.msra.mxu0 %v1390
        %1470 = vmatpush.msra.mxu0 %v1387
        %1471 = vmatpush.msra.mxu0 %v1384
        %1472 = vmatpush.msra.mxu0 %v1381
        %1473 = vmatmul.f32.gmra.mxu0 %v1378
        %v1474 = vpop.f32.mrf.mxu0
        %v1475 = vadd.f32 %v1432, %v1474
        %1476 = vdwg.mxu0
        %1477 = vmatpush.msra.mxu0 %v1427
        %1478 = vmatpush.msra.mxu0 %v1424
        %1479 = vmatpush.msra.mxu0 %v1421
        %1480 = vmatpush.msra.mxu0 %v1418
        %1481 = vmatpush.msra.mxu0 %v1415
        %1482 = vmatpush.msra.mxu0 %v1412
        %1483 = vmatpush.msra.mxu0 %v1409
        %1484 = vmatpush.msra.mxu0 %v1406
        %1485 = vmatpush.msra.mxu0 %v1403
        %1486 = vmatpush.msra.mxu0 %v1400
        %1487 = vmatpush.msra.mxu0 %v1397
        %1488 = vmatpush.msra.mxu0 %v1394
        %1489 = vmatpush.msra.mxu0 %v1391
        %1490 = vmatpush.msra.mxu0 %v1388
        %1491 = vmatpush.msra.mxu0 %v1385
        %1492 = vmatpush.msra.mxu0 %v1382
        %1493 = vmatmul.f32.gmra.mxu0 %v1378
        %v1494 = vpop.f32.mrf.mxu0
        %v1495 = vadd.f32 %v1433, %v1494
        %1496 = vdwg.mxu0
        %1498 = vrot.lane.b32.xlu0 %v1455, 96
        %v1499 = vpop.permute.xlu0 %1498
        %1500 = vrot.lane.b32.xlu0 %v1455, 64
        %v1501 = vpop.permute.xlu0 %1500
        %1502 = vrot.lane.b32.xlu0 %v1455, 32
        %v1503 = vpop.permute.xlu0 %1502
        %1505 = vrot.lane.b32.xlu0 %v1475, 96
        %v1506 = vpop.permute.xlu0 %1505
        %1507 = vrot.lane.b32.xlu0 %v1475, 64
        %v1508 = vpop.permute.xlu0 %1507
        %1509 = vrot.lane.b32.xlu0 %v1475, 32
        %v1510 = vpop.permute.xlu0 %1509
        %1512 = vrot.lane.b32.xlu0 %v1495, 96
        %v1513 = vpop.permute.xlu0 %1512
        %1515 = vrot.lane.b32.xlu0 %v1495, 64
        %v1516 = vpop.permute.xlu0 %1515
        %1518 = vrot.lane.b32.xlu0 %v1495, 32
        %v1519 = vpop.permute.xlu0 %1518
        %v1521 = vsel %vm966, %v1455, 0
        %v1523 = vsel %vm966, %v1499, 0
        %v1525 = vsel %vm966, %v1501, 0
        %v1527 = vsel %vm966, %v1503, 0
        %v1529 = vsel %vm966, %v1475, 0
        %v1531 = vsel %vm966, %v1506, 0
        %v1533 = vsel %vm966, %v1508, 0
        %v1535 = vsel %vm966, %v1510, 0
        %1537 = vmatpush.xpose.msra.mxu0 0.0
        %1538 = vmatpush.xpose.msra.mxu0 0.0
        %1539 = vmatpush.xpose.msra.mxu0 0.0
        %1540 = vmatpush.xpose.msra.mxu0 0.0
        %1541 = vmatpush.xpose.msra.mxu0 0.0
        %1542 = vmatpush.xpose.msra.mxu0 0.0
        %1543 = vmatpush.xpose.msra.mxu0 0.0
        %1544 = vmatpush.xpose.msra.mxu0 0.0
        %1545 = vmatpush.xpose.msra.mxu0 0.0
        %1546 = vmatpush.xpose.msra.mxu0 0.0
        %1547 = vmatpush.xpose.msra.mxu0 0.0
        %1548 = vmatpush.xpose.msra.mxu0 0.0
        %1549 = vmatpush.xpose.msra.mxu0 %v1535
        %1550 = vmatpush.xpose.msra.mxu0 %v1533
        %1551 = vmatpush.xpose.msra.mxu0 %v1531
        %1552 = vmatpush.xpose.msra.mxu0 %v1529
        %1553 = vmatmul.f32.gmra.mxu0 %v1521
        %v1554 = vpop.f32.mrf.mxu0
        %v1555 = vadd.f32 %v962, %v1554
        %1556 = vmatmul.f32.gmra.mxu0 %v1523
        %v1557 = vpop.f32.mrf.mxu0
        %v1558 = vadd.f32 %v963, %v1557
        %1559 = vmatmul.f32.gmra.mxu0 %v1525
        %v1560 = vpop.f32.mrf.mxu0
        %v1561 = vadd.f32 %v964, %v1560
        %1562 = vmatmul.f32.gmra.mxu0 %v1527
        %v1563 = vpop.f32.mrf.mxu0
        %v1564 = vadd.f32 %v965, %v1563
        %1565 = vdwg.mxu0
        %v1566 = vsel %vm966, %v1555, -inf
        %1567 = vmax.xlane.f32.xlu0 %v1566
        %v1568 = vpop.xlane.xlu0 %1567
        %v1569 = vsel %vm966, %v1558, -inf
        %1570 = vmax.xlane.f32.xlu0 %v1569
        %v1571 = vpop.xlane.xlu0 %1570
        %v1572 = vsel %vm966, %v1561, -inf
        %1573 = vmax.xlane.f32.xlu0 %v1572
        %v1574 = vpop.xlane.xlu0 %1573
        %v1575 = vsel %vm966, %v1564, -inf
        %1576 = vmax.xlane.f32.xlu0 %v1575
        %v1577 = vpop.xlane.xlu0 %1576
        %v1578 = vsub.f32 %v1555, %v1568
        %v1579 = vsub.f32 %v1558, %v1571
        %v1580 = vsub.f32 %v1561, %v1574
        %v1581 = vsub.f32 %v1564, %v1577
        %v1582 = vmul.f32 %v1578, 1.442695
        %v1583 = vpow.pop %v1582
        %v1584 = vmul.f32 %v1579, 1.442695
        %v1585 = vpow.pop %v1584
        %v1586 = vmul.f32 %v1580, 1.442695
        %v1587 = vpow.pop %v1586
        %v1588 = vmul.f32 %v1581, 1.442695
        %v1589 = vpow.pop %v1588
        %v1590 = vsel %vm966, %v1583, 0.0
        %1591 = vadd.xlane.f32.xlu0 %v1590
        %v1592 = vpop.xlane.xlu0 %1591
        %v1593 = vsel %vm966, %v1585, 0.0
        %1594 = vadd.xlane.f32.xlu0 %v1593
        %v1595 = vpop.xlane.xlu0 %1594
        %v1596 = vsel %vm966, %v1587, 0.0
        %1597 = vadd.xlane.f32.xlu0 %v1596
        %v1598 = vpop.xlane.xlu0 %1597
        %v1599 = vsel %vm966, %v1589, 0.0
        %1600 = vadd.xlane.f32.xlu0 %v1599
        %v1601 = vpop.xlane.xlu0 %1600
        %v1602 = vrcp.pop %v1592
        %v1603 = vrcp.pop %v1595
        %v1604 = vrcp.pop %v1598
        %v1605 = vrcp.pop %v1601
        %v1606 = vmul.f32 %v1583, %v1602
        %v1607 = vmul.f32 %v1585, %v1603
        %v1608 = vmul.f32 %v1587, %v1604
        %v1609 = vmul.f32 %v1589, %v1605
        %v1611 = vsel %vm966, %v1606, 0
        %v1614 = vsel %vm966, %v1607, 0
        %v1617 = vsel %vm966, %v1608, 0
        %v1620 = vsel %vm966, %v1609, 0
        %1622 = vmatpush.msra.mxu0 0.0
        %1623 = vmatpush.msra.mxu0 0.0
        %1624 = vmatpush.msra.mxu0 0.0
        %1625 = vmatpush.msra.mxu0 0.0
        %1626 = vmatpush.msra.mxu0 0.0
        %1627 = vmatpush.msra.mxu0 0.0
        %1628 = vmatpush.msra.mxu0 0.0
        %1629 = vmatpush.msra.mxu0 0.0
        %1630 = vmatpush.msra.mxu0 0.0
        %1631 = vmatpush.msra.mxu0 0.0
        %1632 = vmatpush.msra.mxu0 0.0
        %1633 = vmatpush.msra.mxu0 0.0
        %1634 = vmatpush.msra.mxu0 %v1519
        %1635 = vmatpush.msra.mxu0 %v1516
        %1636 = vmatpush.msra.mxu0 %v1513
        %1637 = vmatpush.msra.mxu0 %v1495
        %1638 = vmatmul.f32.gmra.mxu0 %v1611
        %v1639 = vpop.f32.mrf.mxu0
        %v1640 = vadd.f32 0.0, %v1639
        %1641 = vmatmul.f32.gmra.mxu0 %v1614
        %v1642 = vpop.f32.mrf.mxu0
        %v1643 = vadd.f32 0.0, %v1642
        %1644 = vmatmul.f32.gmra.mxu0 %v1617
        %v1645 = vpop.f32.mrf.mxu0
        %v1646 = vadd.f32 0.0, %v1645
        %1647 = vmatmul.f32.gmra.mxu0 %v1620
        %v1648 = vpop.f32.mrf.mxu0
        %v1649 = vadd.f32 0.0, %v1648
        %1650 = vdwg.mxu0
        %1652 = vrot.lane.b32.xlu0 %v1643, 32
        %v1653 = vpop.permute.xlu0 %1652
        %1656 = vrot.lane.b32.xlu0 %v1646, 64
        %v1657 = vpop.permute.xlu0 %1656
        %1660 = vrot.lane.b32.xlu0 %v1649, 96
        %v1661 = vpop.permute.xlu0 %1660
        %v1663 = vsel %vm966, %v1640, %v1653
        %v1664 = vsel %vm1110, %v1663, %v1657
        %v1665 = vsel %vm1112, %v1664, %v1661
        %s1666 = scalar_lea.vmem [#allocation7], 128
        %v1667 = vld [vmem:[%s1666] sm:$0xff]
        %v1668 = vld [vmem:[%s1666 + $0x8] sm:$0xff]
        %v1669 = vld [vmem:[%s1666 + $0x10] sm:$0xff]
        %v1670 = vld [vmem:[%s1666 + $0x18] sm:$0xff]
        %v1671 = vld [vmem:[%s1666 + $0x20] sm:$0xff]
        %v1672 = vld [vmem:[%s1666 + $0x28] sm:$0xff]
        %v1673 = vld [vmem:[%s1666 + $0x30] sm:$0xff]
        %v1674 = vld [vmem:[%s1666 + $0x38] sm:$0xff]
        %v1675 = vld [vmem:[%s1666 + $0x40] sm:$0xff]
        %v1676 = vld [vmem:[%s1666 + $0x48] sm:$0xff]
        %v1677 = vld [vmem:[%s1666 + $0x50] sm:$0xff]
        %v1678 = vld [vmem:[%s1666 + $0x58] sm:$0xff]
        %v1679 = vld [vmem:[%s1666 + $0x60] sm:$0xff]
        %v1680 = vld [vmem:[%s1666 + $0x68] sm:$0xff]
        %v1681 = vld [vmem:[%s1666 + $0x70] sm:$0xff]
        %v1682 = vld [vmem:[%s1666 + $0x78] sm:$0xff]
        %s1683 = scalar_lea.vmem [#allocation8], 1
        %v1684 = vld [vmem:[%s1683] sm:$0x1]
        %v1686 = vperm.slane %v1684, 0
        %1688 = vmatpush.msra.mxu0 %v1682
        %1689 = vmatpush.msra.mxu0 %v1681
        %1690 = vmatpush.msra.mxu0 %v1680
        %1691 = vmatpush.msra.mxu0 %v1679
        %1692 = vmatpush.msra.mxu0 %v1678
        %1693 = vmatpush.msra.mxu0 %v1677
        %1694 = vmatpush.msra.mxu0 %v1676
        %1695 = vmatpush.msra.mxu0 %v1675
        %1696 = vmatpush.msra.mxu0 %v1674
        %1697 = vmatpush.msra.mxu0 %v1673
        %1698 = vmatpush.msra.mxu0 %v1672
        %1699 = vmatpush.msra.mxu0 %v1671
        %1700 = vmatpush.msra.mxu0 %v1670
        %1701 = vmatpush.msra.mxu0 %v1669
        %1702 = vmatpush.msra.mxu0 %v1668
        %1703 = vmatpush.msra.mxu0 %v1667
        %1704 = vmatmul.f32.gmra.mxu0 %v1665
        %v1705 = vpop.f32.mrf.mxu0
        %v1706 = vadd.f32 %v1686, %v1705
        %1707 = vdwg.mxu0
        %v1708 = vadd.f32 %v1378, %v1706
        %s1709 = scalar_lea.vmem [#allocation10], 1
        %v1710 = vld [vmem:[%s1709] sm:$0x1]
        %s1711 = scalar_lea.vmem [#allocation11], 1
        %v1712 = vld [vmem:[%s1711] sm:$0x1]
        %1713 = vadd.xlane.f32.xlu0 %v1708
        %v1714 = vpop.xlane.xlu0 %1713
        %v1715 = vmul.f32 %v1714, %v1165
        %v1716 = vsub.f32 %v1708, %v1715
        %v1717 = vmul.f32 %v1716, %v1716
        %1718 = vadd.xlane.f32.xlu0 %v1717
        %v1719 = vpop.xlane.xlu0 %1718
        %v1720 = vmul.f32 %v1719, %v1165
        %v1721 = vadd.f32 %v1720, 1e-05
        %v1722 = vrsqrt.pop %v1721
        %v1723 = vmul.f32 %v1722, %v1721
        %v1724 = vmul.f32 %v1723, %v1722
        %v1725 = vmul.f32 0.5, %v1724
        %v1726 = vsub.f32 1.5, %v1725
        %v1727 = vmul.f32 %v1722, %v1726
        %vm1728 = vweird.f32 %v1721
        %vm1729 = vweird.f32 %v1722
        %vm1730 = vmor %vm1728, %vm1729
        %v1731 = vsel %vm1730, %v1722, %v1727
        %v1732 = vmul.f32 %v1716, %v1731
        %v1734 = vperm.slane %v1710, 0
        %v1736 = vmul.f32 %v1732, %v1734
        %v1738 = vperm.slane %v1712, 0
        %v1740 = vadd.f32 %v1736, %v1738
        %s1741 = scalar_lea.vmem [#allocation13], 256
        %v1742 = vld [vmem:[%s1741] sm:$0xff]
        %v1743 = vld [vmem:[%s1741 + $0x8] sm:$0xff]
        %v1744 = vld [vmem:[%s1741 + $0x10] sm:$0xff]
        %v1745 = vld [vmem:[%s1741 + $0x18] sm:$0xff]
        %v1746 = vld [vmem:[%s1741 + $0x20] sm:$0xff]
        %v1747 = vld [vmem:[%s1741 + $0x28] sm:$0xff]
        %v1748 = vld [vmem:[%s1741 + $0x30] sm:$0xff]
        %v1749 = vld [vmem:[%s1741 + $0x38] sm:$0xff]
        %v1750 = vld [vmem:[%s1741 + $0x40] sm:$0xff]
        %v1751 = vld [vmem:[%s1741 + $0x48] sm:$0xff]
        %v1752 = vld [vmem:[%s1741 + $0x50] sm:$0xff]
        %v1753 = vld [vmem:[%s1741 + $0x58] sm:$0xff]
        %v1754 = vld [vmem:[%s1741 + $0x60] sm:$0xff]
        %v1755 = vld [vmem:[%s1741 + $0x68] sm:$0xff]
        %v1756 = vld [vmem:[%s1741 + $0x70] sm:$0xff]
        %v1757 = vld [vmem:[%s1741 + $0x78] sm:$0xff]
        %v1758 = vld [vmem:[%s1741 + $0x80] sm:$0xff]
        %v1759 = vld [vmem:[%s1741 + $0x88] sm:$0xff]
        %v1760 = vld [vmem:[%s1741 + $0x90] sm:$0xff]
        %v1761 = vld [vmem:[%s1741 + $0x98] sm:$0xff]
        %v1762 = vld [vmem:[%s1741 + $0xa0] sm:$0xff]
        %v1763 = vld [vmem:[%s1741 + $0xa8] sm:$0xff]
        %v1764 = vld [vmem:[%s1741 + $0xb0] sm:$0xff]
        %v1765 = vld [vmem:[%s1741 + $0xb8] sm:$0xff]
        %v1766 = vld [vmem:[%s1741 + $0xc0] sm:$0xff]
        %v1767 = vld [vmem:[%s1741 + $0xc8] sm:$0xff]
        %v1768 = vld [vmem:[%s1741 + $0xd0] sm:$0xff]
        %v1769 = vld [vmem:[%s1741 + $0xd8] sm:$0xff]
        %v1770 = vld [vmem:[%s1741 + $0xe0] sm:$0xff]
        %v1771 = vld [vmem:[%s1741 + $0xe8] sm:$0xff]
        %v1772 = vld [vmem:[%s1741 + $0xf0] sm:$0xff]
        %v1773 = vld [vmem:[%s1741 + $0xf8] sm:$0xff]
        %s1774 = scalar_lea.vmem [#allocation14], 2
        %v1775 = vld [vmem:[%s1774] sm:$0x3]
        %v1777 = vperm.slane %v1775, 0
        %v1778 = vperm.slane %v1775, 1
        %1781 = vmatpush.msra.mxu0 %v1772
        %1782 = vmatpush.msra.mxu0 %v1770
        %1783 = vmatpush.msra.mxu0 %v1768
        %1784 = vmatpush.msra.mxu0 %v1766
        %1785 = vmatpush.msra.mxu0 %v1764
        %1786 = vmatpush.msra.mxu0 %v1762
        %1787 = vmatpush.msra.mxu0 %v1760
        %1788 = vmatpush.msra.mxu0 %v1758
        %1789 = vmatpush.msra.mxu0 %v1756
        %1790 = vmatpush.msra.mxu0 %v1754
        %1791 = vmatpush.msra.mxu0 %v1752
        %1792 = vmatpush.msra.mxu0 %v1750
        %1793 = vmatpush.msra.mxu0 %v1748
        %1794 = vmatpush.msra.mxu0 %v1746
        %1795 = vmatpush.msra.mxu0 %v1744
        %1796 = vmatpush.msra.mxu0 %v1742
        %1797 = vmatmul.f32.gmra.mxu0 %v1740
        %v1798 = vpop.f32.mrf.mxu0
        %v1799 = vadd.f32 %v1777, %v1798
        %1800 = vdwg.mxu0
        %1801 = vmatpush.msra.mxu0 %v1773
        %1802 = vmatpush.msra.mxu0 %v1771
        %1803 = vmatpush.msra.mxu0 %v1769
        %1804 = vmatpush.msra.mxu0 %v1767
        %1805 = vmatpush.msra.mxu0 %v1765
        %1806 = vmatpush.msra.mxu0 %v1763
        %1807 = vmatpush.msra.mxu0 %v1761
        %1808 = vmatpush.msra.mxu0 %v1759
        %1809 = vmatpush.msra.mxu0 %v1757
        %1810 = vmatpush.msra.mxu0 %v1755
        %1811 = vmatpush.msra.mxu0 %v1753
        %1812 = vmatpush.msra.mxu0 %v1751
        %1813 = vmatpush.msra.mxu0 %v1749
        %1814 = vmatpush.msra.mxu0 %v1747
        %1815 = vmatpush.msra.mxu0 %v1745
        %1816 = vmatpush.msra.mxu0 %v1743
        %1817 = vmatmul.f32.gmra.mxu0 %v1740
        %v1818 = vpop.f32.mrf.mxu0
        %v1819 = vadd.f32 %v1778, %v1818
        %1820 = vdwg.mxu0
        %v1821 = vmax.f32 %v1799, 0.0
        %v1822 = vmax.f32 %v1819, 0.0
        %s1823 = scalar_lea.vmem [#allocation16], 256
        %v1824 = vld [vmem:[%s1823] sm:$0xff]
        %v1825 = vld [vmem:[%s1823 + $0x8] sm:$0xff]
        %v1826 = vld [vmem:[%s1823 + $0x10] sm:$0xff]
        %v1827 = vld [vmem:[%s1823 + $0x18] sm:$0xff]
        %v1828 = vld [vmem:[%s1823 + $0x20] sm:$0xff]
        %v1829 = vld [vmem:[%s1823 + $0x28] sm:$0xff]
        %v1830 = vld [vmem:[%s1823 + $0x30] sm:$0xff]
        %v1831 = vld [vmem:[%s1823 + $0x38] sm:$0xff]
        %v1832 = vld [vmem:[%s1823 + $0x40] sm:$0xff]
        %v1833 = vld [vmem:[%s1823 + $0x48] sm:$0xff]
        %v1834 = vld [vmem:[%s1823 + $0x50] sm:$0xff]
        %v1835 = vld [vmem:[%s1823 + $0x58] sm:$0xff]
        %v1836 = vld [vmem:[%s1823 + $0x60] sm:$0xff]
        %v1837 = vld [vmem:[%s1823 + $0x68] sm:$0xff]
        %v1838 = vld [vmem:[%s1823 + $0x70] sm:$0xff]
        %v1839 = vld [vmem:[%s1823 + $0x78] sm:$0xff]
        %v1840 = vld [vmem:[%s1823 + $0x80] sm:$0xff]
        %v1841 = vld [vmem:[%s1823 + $0x88] sm:$0xff]
        %v1842 = vld [vmem:[%s1823 + $0x90] sm:$0xff]
        %v1843 = vld [vmem:[%s1823 + $0x98] sm:$0xff]
        %v1844 = vld [vmem:[%s1823 + $0xa0] sm:$0xff]
        %v1845 = vld [vmem:[%s1823 + $0xa8] sm:$0xff]
        %v1846 = vld [vmem:[%s1823 + $0xb0] sm:$0xff]
        %v1847 = vld [vmem:[%s1823 + $0xb8] sm:$0xff]
        %v1848 = vld [vmem:[%s1823 + $0xc0] sm:$0xff]
        %v1849 = vld [vmem:[%s1823 + $0xc8] sm:$0xff]
        %v1850 = vld [vmem:[%s1823 + $0xd0] sm:$0xff]
        %v1851 = vld [vmem:[%s1823 + $0xd8] sm:$0xff]
        %v1852 = vld [vmem:[%s1823 + $0xe0] sm:$0xff]
        %v1853 = vld [vmem:[%s1823 + $0xe8] sm:$0xff]
        %v1854 = vld [vmem:[%s1823 + $0xf0] sm:$0xff]
        %v1855 = vld [vmem:[%s1823 + $0xf8] sm:$0xff]
        %s1856 = scalar_lea.vmem [#allocation17], 1
        %v1857 = vld [vmem:[%s1856] sm:$0x1]
        %v1859 = vperm.slane %v1857, 0
        %1861 = vmatpush.msra.mxu0 %v1839
        %1862 = vmatpush.msra.mxu0 %v1838
        %1863 = vmatpush.msra.mxu0 %v1837
        %1864 = vmatpush.msra.mxu0 %v1836
        %1865 = vmatpush.msra.mxu0 %v1835
        %1866 = vmatpush.msra.mxu0 %v1834
        %1867 = vmatpush.msra.mxu0 %v1833
        %1868 = vmatpush.msra.mxu0 %v1832
        %1869 = vmatpush.msra.mxu0 %v1831
        %1870 = vmatpush.msra.mxu0 %v1830
        %1871 = vmatpush.msra.mxu0 %v1829
        %1872 = vmatpush.msra.mxu0 %v1828
        %1873 = vmatpush.msra.mxu0 %v1827
        %1874 = vmatpush.msra.mxu0 %v1826
        %1875 = vmatpush.msra.mxu0 %v1825
        %1876 = vmatpush.msra.mxu0 %v1824
        %1877 = vmatmul.f32.gmra.mxu0 %v1821
        %v1878 = vpop.f32.mrf.mxu0
        %v1879 = vadd.f32 %v1859, %v1878
        %1880 = vdwg.mxu0
        %1881 = vmatpush.msra.mxu0 %v1855
        %1882 = vmatpush.msra.mxu0 %v1854
        %1883 = vmatpush.msra.mxu0 %v1853
        %1884 = vmatpush.msra.mxu0 %v1852
        %1885 = vmatpush.msra.mxu0 %v1851
        %1886 = vmatpush.msra.mxu0 %v1850
        %1887 = vmatpush.msra.mxu0 %v1849
        %1888 = vmatpush.msra.mxu0 %v1848
        %1889 = vmatpush.msra.mxu0 %v1847
        %1890 = vmatpush.msra.mxu0 %v1846
        %1891 = vmatpush.msra.mxu0 %v1845
        %1892 = vmatpush.msra.mxu0 %v1844
        %1893 = vmatpush.msra.mxu0 %v1843
        %1894 = vmatpush.msra.mxu0 %v1842
        %1895 = vmatpush.msra.mxu0 %v1841
        %1896 = vmatpush.msra.mxu0 %v1840
        %1897 = vmatmul.f32.gmra.mxu0 %v1822
        %v1898 = vpop.f32.mrf.mxu0
        %v1899 = vadd.f32 %v1879, %v1898
        %1900 = vdwg.mxu0
        %v1901 = vadd.f32 %v1740, %v1899
        %s1902 = scalar_lea.vmem [#allocation19], 1
        %v1903 = vld [vmem:[%s1902] sm:$0x1]
        %s1904 = scalar_lea.vmem [#allocation20], 1
        %v1905 = vld [vmem:[%s1904] sm:$0x1]
        %1906 = vadd.xlane.f32.xlu0 %v1901
        %v1907 = vpop.xlane.xlu0 %1906
        %v1908 = vmul.f32 %v1907, %v1165
        %v1909 = vsub.f32 %v1901, %v1908
        %v1910 = vmul.f32 %v1909, %v1909
        %1911 = vadd.xlane.f32.xlu0 %v1910
        %v1912 = vpop.xlane.xlu0 %1911
        %v1913 = vmul.f32 %v1912, %v1165
        %v1914 = vadd.f32 %v1913, 1e-05
        %v1915 = vrsqrt.pop %v1914
        %v1916 = vmul.f32 %v1915, %v1914
        %v1917 = vmul.f32 %v1916, %v1915
        %v1918 = vmul.f32 0.5, %v1917
        %v1919 = vsub.f32 1.5, %v1918
        %v1920 = vmul.f32 %v1915, %v1919
        %vm1921 = vweird.f32 %v1914
        %vm1922 = vweird.f32 %v1915
        %vm1923 = vmor %vm1921, %vm1922
        %v1924 = vsel %vm1923, %v1915, %v1920
        %v1925 = vmul.f32 %v1909, %v1924
        %v1927 = vperm.slane %v1903, 0
        %v1929 = vmul.f32 %v1925, %v1927
        %v1931 = vperm.slane %v1905, 0
        %v1933 = vadd.f32 %v1929, %v1931
        %v1934 = vrot.slane %v1933, 4
        %v1935 = vadd.f32 %v1933, %v1934
        %v1936 = vrot.slane %v1935, 2
        %v1937 = vadd.f32 %v1935, %v1936
        %v1938 = vrot.slane %v1937, 1
        %v1939 = vadd.f32 %v1937, %v1938
        %v1940 = vrcp.pop 8.0
        %v1941 = vmul.f32 8.0, %v1940
        %v1942 = vsub.f32 1.0, %v1941
        %v1943 = vmul.f32 %v1940, %v1942
        %v1944 = vadd.f32 %v1940, %v1943
        %vm1945 = vweird.f32 %v1940
        %v1946 = vsel %vm1945, %v1940, %v1944
        %v1947 = vmul.f32 %v1939, %v1946
        %v1948 = vld [vmem:[#allocation22] sm:$0x1]
        %v1949 = vmul.f32 %v1947, %v1948
        %vm1950 = vcmask 1040384
        %v1951 = vsel %vm1950, %v1949, 0.0
        %1952 = vadd.xlane.f32.xlu0 %v1951
        %v1953 = vpop.xlane.xlu0 %1952
        %v1954 = vld [vmem:[#allocation2] sm:$0x1]
        %v1955 = vadd.f32 %v1953, %v1954
        %vm1956 = vcmask 0
        %1957 = vst.msk [vmem:[%s783] sm:$0x1] %vm1956, %v1955
        %p1958 = scmp.lt.s32.totalorder %s38, 1
        %s1959 = scalar_select %p1958, %s38, 1
        %s1960 = scalar_lea.vmem %s18, %s1959
        // Predicated region
        $region145: #{transformer_regressor.1} parent=91 // pred_check
          %p1961 = pneg %p439
        $region146: #{transformer_regressor.1} parent=91 // pred_check_branch
          %1963 = sbr.rel (%p1961) target = $region148
        $region147: #{transformer_regressor.1} parent=91 // pred_region
          _
        $region148: #{transformer_regressor.1} parent=91 // pred_fallthru
          _
      $region92: #{transformer_regressor.1} parent=5 // pred_fallthru
        _
      %p1964 = scmp.le.s32.totalorder 2, %s33
      // Predicated region
      $region149: #{transformer_regressor.1} parent=5 // pred_check
        %p1965 = pneg %p1964
      $region150: #{transformer_regressor.1} parent=5 // pred_check_branch
        %1967 = sbr.rel (%p1965) target = $region152
      $region151: #{transformer_regressor.1} parent=5 // pred_region
        %s1968 = ssub.s32 %s33, 2
        // Predicated region
        $region153: #{transformer_regressor.1} parent=151 // pred_check
          %p1969 = pneg %p445
        $region154: #{transformer_regressor.1} parent=151 // pred_check_branch
          %1971 = sbr.rel (%p1969) target = $region156
        $region155: #{transformer_regressor.1} parent=151 // pred_region
          %p1972 = scmp.lt.s32.totalorder %s39, 1
          %s1973 = scalar_select %p1972, %s39, 1
          %s1974 = scalar_lea.vmem %s18, %s1973
        $region156: #{transformer_regressor.1} parent=151 // pred_fallthru
          _
      $region152: #{transformer_regressor.1} parent=5 // pred_fallthru
        _
    $region6: #{transformer_regressor.1} parent=1 // loop_footer
      %s37 = sadd.s32 1, %s33
    $region7: #{transformer_regressor.1} parent=1 // loop_footer_branch
      %32 = sbr.rel target = $region3
    $region8: #{transformer_regressor.1} parent=1 // loop_exit
      _
    %1975 = vsyncpa [#allocation4], 1
    %s1976 = scalar_lea.sflag [#allocation4], 1
    %1977 = vsyncpa %s1976, 1
    %1978 = vsyncpa [#allocation6], 1
    %1979 = vsyncpa [#allocation9], 1
    %1980 = vsyncpa [#allocation12], 1
    %1981 = vsyncpa [#allocation15], 1
    %1982 = vsyncpa [#allocation18], 1
    %1983 = vsyncpa [#allocation21], 1

</llo_original>
